<compile_context>
chip_gen: v7x
topology: tpu7x:2x2x1
jax: 0.10.0
libtpu: 0.0.40
codegen_flags: <defaults>
</compile_context>

<pallas_src>
import functools

import jax
import jax.numpy as jnp
from jax import lax
from jax.experimental import pallas as pl
from jax.experimental.pallas import tpu as pltpu


# ---------------------------------------------------------------------------
# Fused TemporalBlock kernel (one batch element per grid step).
# ---------------------------------------------------------------------------
def _temporal_block_kernel(*refs, kernel_size, dilation, has_downsample):
    if has_downsample:
        (x_ref, w1_ref, b1_ref, w2_ref, b2_ref, wd_ref, bd_ref, o_ref) = refs
    else:
        (x_ref, w1_ref, b1_ref, w2_ref, b2_ref, o_ref) = refs
        wd_ref = bd_ref = None

    x = x_ref[0].astype(jnp.float32)          # (C_in, L)
    L = x.shape[1]
    c_out = o_ref.shape[1]
    K = kernel_size

    def causal_dilated_conv(inp, w_ref, b_ref):
        # inp: (C, L); w_ref: (K, C_out, C); b_ref: (C_out, 1)
        # Causal conv == symmetric-pad conv + Chomp1d, fused:
        # tap k uses the input right-shifted by s = (K-1-k)*dilation.
        acc = jnp.zeros((c_out, L), jnp.float32)
        for k in range(K):
            s = (K - 1 - k) * dilation
            if s == 0:
                xs = inp
            else:
                xs = jnp.concatenate(
                    [jnp.zeros((inp.shape[0], s), inp.dtype), inp[:, : L - s]],
                    axis=-1,
                )
            acc = acc + jnp.dot(w_ref[k], xs, preferred_element_type=jnp.float32)
        return acc + b_ref[...]               # bias broadcasts (C_out,1)->(C_out,L)

    h = jnp.maximum(causal_dilated_conv(x, w1_ref, b1_ref), 0.0)      # conv1+ReLU
    # dropout1: identity (eval)
    out = jnp.maximum(causal_dilated_conv(h, w2_ref, b2_ref), 0.0)    # conv2+ReLU
    # dropout2: identity (eval)

    if has_downsample:
        res = jnp.dot(wd_ref[...], x, preferred_element_type=jnp.float32) + bd_ref[...]
    else:
        res = x

    o_ref[0] = jnp.maximum(out + res, 0.0).astype(o_ref.dtype)


def temporal_block(x, w1, b1, w2, b2, wd, bd, *, kernel_size, dilation):
    """One TemporalBlock forward.

    x  : (N, C_in, L)
    w1 : (K, C_out, C_in)   weight-norm-applied conv1 weight (tap-major)
    b1 : (C_out, 1)
    w2 : (K, C_out, C_out)
    b2 : (C_out, 1)
    wd : (C_out, C_in) or None   1x1 downsample conv weight
    bd : (C_out, 1) or None
    """
    n, c_in, L = x.shape
    K, c_out, _ = w1.shape
    has_ds = wd is not None

    kernel = functools.partial(
        _temporal_block_kernel,
        kernel_size=kernel_size,
        dilation=dilation,
        has_downsample=has_ds,
    )

    def full(shape):
        return pl.BlockSpec(shape, lambda i, _s=shape: (0,) * len(_s))

    in_specs = [
        pl.BlockSpec((1, c_in, L), lambda i: (i, 0, 0)),
        full((K, c_out, c_in)),
        full((c_out, 1)),
        full((K, c_out, c_out)),
        full((c_out, 1)),
    ]
    args = [x, w1, b1, w2, b2]
    if has_ds:
        in_specs += [full((c_out, c_in)), full((c_out, 1))]
        args += [wd, bd]

    itemsize = jnp.dtype(x.dtype).itemsize
    flops = 2 * n * L * c_out * (c_in * K + c_out * K + (c_in if has_ds else 0))
    bytes_accessed = itemsize * (
        x.size + n * c_out * L + w1.size + b1.size + w2.size + b2.size
        + ((wd.size + bd.size) if has_ds else 0)
    )
    cost = pl.CostEstimate(flops=flops, transcendentals=0,
                           bytes_accessed=bytes_accessed)

    return pl.pallas_call(
        kernel,
        out_shape=jax.ShapeDtypeStruct((n, c_out, L), x.dtype),
        grid_spec=pltpu.PrefetchScalarGridSpec(
            num_scalar_prefetch=0,
            grid=(n,),
            in_specs=in_specs,
            out_specs=pl.BlockSpec((1, c_out, L), lambda i: (i, 0, 0)),
        ),
        compiler_params=pltpu.CompilerParams(dimension_semantics=("parallel",)),
        cost_estimate=cost,
    )(*args)


# ---------------------------------------------------------------------------
# TemporalConvNet wrapper
# ---------------------------------------------------------------------------
def _weight_norm(v, g):
    # PyTorch weight_norm with dim=0: per-output-channel norm over (C_in, K).
    norm = jnp.sqrt(jnp.sum(v * v, axis=(1, 2), keepdims=True))
    return (g.reshape(-1, 1, 1) / norm) * v


def temporal_conv_net(x, params, kernel_size=2):
    for i, p in enumerate(params):
        dilation = 2 ** i
        w1 = jnp.transpose(_weight_norm(p["v1"], p["g1"]), (2, 0, 1))  # (K,Co,Ci)
        w2 = jnp.transpose(_weight_norm(p["v2"], p["g2"]), (2, 0, 1))  # (K,Co,Co)
        b1 = p["b1"].reshape(-1, 1)
        b2 = p["b2"].reshape(-1, 1)
        wd = p.get("wd")
        bd = p["bd"].reshape(-1, 1) if "bd" in p else None
        x = temporal_block(x, w1, b1, w2, b2, wd, bd,
                           kernel_size=kernel_size, dilation=dilation)
    return x


# ---------------------------------------------------------------------------
# Pure-JAX reference (PyTorch semantics: symmetric pad conv + Chomp1d)
# ---------------------------------------------------------------------------
def _ref_temporal_conv_net(x, params, kernel_size=2):
    dn = ("NCH", "OIH", "NCH")
    for i, p in enumerate(params):
        dilation = 2 ** i
        pad = (kernel_size - 1) * dilation
        w1 = _weight_norm(p["v1"], p["g1"])
        w2 = _weight_norm(p["v2"], p["g2"])

        def conv(inp, w, b, pad=pad, dilation=dilation):
            y = lax.conv_general_dilated(
                inp, w, window_strides=(1,), padding=[(pad, pad)],
                rhs_dilation=(dilation,), dimension_numbers=dn)
            if pad > 0:
                y = y[:, :, :-pad]          # Chomp1d
            return y + b.reshape(1, -1, 1)

        h = jax.nn.relu(conv(x, w1, p["b1"]))
        out = jax.nn.relu(conv(h, w2, p["b2"]))
        if "wd" in p:
            res = jnp.einsum("oc,ncl->nol", p["wd"], x) + p["bd"].reshape(1, -1, 1)
        else:
            res = x
        x = jax.nn.relu(out + res)
    return x


def make_params(key, num_inputs, num_channels, kernel_size):
    params = []
    c_prev = num_inputs
    for c_out in num_channels:
        key, k1, k2, k3, k4, k5, k6, k7, k8 = jax.random.split(key, 9)
        p = {
            "v1": 0.01 * jax.random.normal(k1, (c_out, c_prev, kernel_size), jnp.float32),
            "g1": 1.0 + 0.1 * jax.random.normal(k2, (c_out,), jnp.float32),
            "b1": 0.1 * jax.random.normal(k3, (c_out,), jnp.float32),
            "v2": 0.01 * jax.random.normal(k4, (c_out, c_out, kernel_size), jnp.float32),
            "g2": 1.0 + 0.1 * jax.random.normal(k5, (c_out,), jnp.float32),
            "b2": 0.1 * jax.random.normal(k6, (c_out,), jnp.float32),
        }
        if c_prev != c_out:   # TemporalBlock only downsamples when shapes differ
            p["wd"] = 0.01 * jax.random.normal(k7, (c_out, c_prev), jnp.float32)
            p["bd"] = 0.1 * jax.random.normal(k8, (c_out,), jnp.float32)
        params.append(p)
        c_prev = c_out
    return params


if __name__ == "__main__":
    key = jax.random.PRNGKey(0)
    N, C_IN, L = 2, 4, 16
    num_channels = [8, 8, 16]     # exercises both downsample and identity residual
    kernel_size = 2

    key, xk, pk = jax.random.split(key, 3)
    x = jax.random.normal(xk, (N, C_IN, L), jnp.float32)
    params = make_params(pk, C_IN, num_channels, kernel_size)

    fwd = jax.jit(lambda inp: temporal_conv_net(inp, params, kernel_size=kernel_size))
    y = fwd(x)
    jax.block_until_ready(y)

    y_ref = _ref_temporal_conv_net(x, params, kernel_size=kernel_size)
    assert y.shape == (N, num_channels[-1], L), y.shape
    assert jnp.allclose(y, y_ref, rtol=1e-5, atol=1e-5), float(
        jnp.max(jnp.abs(y - y_ref)))

    print("KERNEL_OK")
</pallas_src>

<mosaic_0001>
module attributes {stable_mosaic.version = 11 : i64} {
  func.func @_temporal_block_kernel(%arg0: i32, %arg1: memref<1x8x16xf32, #tpu.memory_space<vmem>>, %arg2: memref<2x16x8xf32, #tpu.memory_space<vmem>>, %arg3: memref<16x1xf32, #tpu.memory_space<vmem>>, %arg4: memref<2x16x16xf32, #tpu.memory_space<vmem>>, %arg5: memref<16x1xf32, #tpu.memory_space<vmem>>, %arg6: memref<16x8xf32, #tpu.memory_space<vmem>>, %arg7: memref<16x1xf32, #tpu.memory_space<vmem>>, %arg8: memref<1x16x16xf32, #tpu.memory_space<vmem>>) attributes {dimension_semantics = [#tpu.dimension_semantics<parallel>], iteration_bounds = array<i64: 2>, scalar_prefetch = 0 : i64, scratch_operands = 0 : i64, tpu.core_type = #tpu.core_type<tc>, window_params = [{transform_indices = @transform_0, window_bounds = array<i64: 1, 8, 16>}, {pipeline_mode = #tpu.pipeline_mode<synchronous>, transform_indices = @transform_1, window_bounds = array<i64: 2, 16, 8>}, {pipeline_mode = #tpu.pipeline_mode<synchronous>, transform_indices = @transform_2, window_bounds = array<i64: 16, 1>}, {pipeline_mode = #tpu.pipeline_mode<synchronous>, transform_indices = @transform_3, window_bounds = array<i64: 2, 16, 16>}, {pipeline_mode = #tpu.pipeline_mode<synchronous>, transform_indices = @transform_4, window_bounds = array<i64: 16, 1>}, {pipeline_mode = #tpu.pipeline_mode<synchronous>, transform_indices = @transform_5, window_bounds = array<i64: 16, 8>}, {pipeline_mode = #tpu.pipeline_mode<synchronous>, transform_indices = @transform_6, window_bounds = array<i64: 16, 1>}, {transform_indices = @transform_7, window_bounds = array<i64: 1, 16, 16>}]} {
    %c0 = arith.constant 0 : index
    %c0_0 = arith.constant 0 : index
    %c0_1 = arith.constant 0 : index
    %0 = vector.load %arg1[%c0, %c0_0, %c0_1] : memref<1x8x16xf32, #tpu.memory_space<vmem>>, vector<1x8x16xf32>
    %1 = vector.shape_cast %0 : vector<1x8x16xf32> to vector<8x16xf32>
    %cst = arith.constant 0.000000e+00 : f32
    %2 = vector.broadcast %cst : f32 to vector<16x16xf32>
    %cst_2 = arith.constant 0.000000e+00 : f32
    %3 = vector.broadcast %cst_2 : f32 to vector<8x4xf32>
    %4 = vector.extract_strided_slice %1 {offsets = [0, 0], sizes = [8, 12], strides = [1, 1]} : vector<8x16xf32> to vector<8x12xf32>
    %5 = tpu.concatenate %3, %4 in 1 : vector<8x4xf32>, vector<8x12xf32> -> vector<8x16xf32>
    %c0_3 = arith.constant 0 : index
    %c0_4 = arith.constant 0 : index
    %c0_5 = arith.constant 0 : index
    %6 = vector.load %arg2[%c0_3, %c0_4, %c0_5] : memref<2x16x8xf32, #tpu.memory_space<vmem>>, vector<1x16x8xf32>
    %7 = vector.shape_cast %6 : vector<1x16x8xf32> to vector<16x8xf32>
    %cst_6 = arith.constant dense<0.000000e+00> : vector<16x16xf32>
    %8 = tpu.matmul %7, %5, %cst_6 {dimension_numbers = #tpu.dot_dimension_numbers<[1], [0], [0], [1], [0, 0, 1, 1], [], []>} : vector<16x8xf32>, vector<8x16xf32>, vector<16x16xf32> -> vector<16x16xf32>
    %9 = arith.addf %2, %8 : vector<16x16xf32>
    %c1 = arith.constant 1 : index
    %c0_7 = arith.constant 0 : index
    %c0_8 = arith.constant 0 : index
    %10 = vector.load %arg2[%c1, %c0_7, %c0_8] : memref<2x16x8xf32, #tpu.memory_space<vmem>>, vector<1x16x8xf32>
    %11 = vector.shape_cast %10 : vector<1x16x8xf32> to vector<16x8xf32>
    %cst_9 = arith.constant dense<0.000000e+00> : vector<16x16xf32>
    %12 = tpu.matmul %11, %1, %cst_9 {dimension_numbers = #tpu.dot_dimension_numbers<[1], [0], [0], [1], [0, 0, 1, 1], [], []>} : vector<16x8xf32>, vector<8x16xf32>, vector<16x16xf32> -> vector<16x16xf32>
    %13 = arith.addf %9, %12 : vector<16x16xf32>
    %c0_10 = arith.constant 0 : index
    %c0_11 = arith.constant 0 : index
    %14 = vector.load %arg3[%c0_10, %c0_11] : memref<16x1xf32, #tpu.memory_space<vmem>>, vector<16x1xf32>
    %15 = vector.broadcast %14 : vector<16x1xf32> to vector<16x16xf32>
    %16 = arith.addf %13, %15 : vector<16x16xf32>
    %cst_12 = arith.constant 0.000000e+00 : f32
    %17 = vector.broadcast %cst_12 : f32 to vector<16x16xf32>
    %18 = arith.maximumf %16, %17 : vector<16x16xf32>
    %cst_13 = arith.constant 0.000000e+00 : f32
    %19 = vector.broadcast %cst_13 : f32 to vector<16x16xf32>
    %cst_14 = arith.constant 0.000000e+00 : f32
    %20 = vector.broadcast %cst_14 : f32 to vector<16x4xf32>
    %21 = vector.extract_strided_slice %18 {offsets = [0, 0], sizes = [16, 12], strides = [1, 1]} : vector<16x16xf32> to vector<16x12xf32>
    %22 = tpu.concatenate %20, %21 in 1 : vector<16x4xf32>, vector<16x12xf32> -> vector<16x16xf32>
    %c0_15 = arith.constant 0 : index
    %c0_16 = arith.constant 0 : index
    %c0_17 = arith.constant 0 : index
    %23 = vector.load %arg4[%c0_15, %c0_16, %c0_17] : memref<2x16x16xf32, #tpu.memory_space<vmem>>, vector<1x16x16xf32>
    %24 = vector.shape_cast %23 : vector<1x16x16xf32> to vector<16x16xf32>
    %cst_18 = arith.constant dense<0.000000e+00> : vector<16x16xf32>
    %25 = tpu.matmul %24, %22, %cst_18 {dimension_numbers = #tpu.dot_dimension_numbers<[1], [0], [0], [1], [0, 0, 1, 1], [], []>} : vector<16x16xf32>, vector<16x16xf32>, vector<16x16xf32> -> vector<16x16xf32>
    %26 = arith.addf %19, %25 : vector<16x16xf32>
    %c1_19 = arith.constant 1 : index
    %c0_20 = arith.constant 0 : index
    %c0_21 = arith.constant 0 : index
    %27 = vector.load %arg4[%c1_19, %c0_20, %c0_21] : memref<2x16x16xf32, #tpu.memory_space<vmem>>, vector<1x16x16xf32>
    %28 = vector.shape_cast %27 : vector<1x16x16xf32> to vector<16x16xf32>
    %cst_22 = arith.constant dense<0.000000e+00> : vector<16x16xf32>
    %29 = tpu.matmul %28, %18, %cst_22 {dimension_numbers = #tpu.dot_dimension_numbers<[1], [0], [0], [1], [0, 0, 1, 1], [], []>} : vector<16x16xf32>, vector<16x16xf32>, vector<16x16xf32> -> vector<16x16xf32>
    %30 = arith.addf %26, %29 : vector<16x16xf32>
    %c0_23 = arith.constant 0 : index
    %c0_24 = arith.constant 0 : index
    %31 = vector.load %arg5[%c0_23, %c0_24] : memref<16x1xf32, #tpu.memory_space<vmem>>, vector<16x1xf32>
    %32 = vector.broadcast %31 : vector<16x1xf32> to vector<16x16xf32>
    %33 = arith.addf %30, %32 : vector<16x16xf32>
    %cst_25 = arith.constant 0.000000e+00 : f32
    %34 = vector.broadcast %cst_25 : f32 to vector<16x16xf32>
    %35 = arith.maximumf %33, %34 : vector<16x16xf32>
    %c0_26 = arith.constant 0 : index
    %c0_27 = arith.constant 0 : index
    %36 = vector.load %arg6[%c0_26, %c0_27] : memref<16x8xf32, #tpu.memory_space<vmem>>, vector<16x8xf32>
    %cst_28 = arith.constant dense<0.000000e+00> : vector<16x16xf32>
    %37 = tpu.matmul %36, %1, %cst_28 {dimension_numbers = #tpu.dot_dimension_numbers<[1], [0], [0], [1], [0, 0, 1, 1], [], []>} : vector<16x8xf32>, vector<8x16xf32>, vector<16x16xf32> -> vector<16x16xf32>
    %c0_29 = arith.constant 0 : index
    %c0_30 = arith.constant 0 : index
    %38 = vector.load %arg7[%c0_29, %c0_30] : memref<16x1xf32, #tpu.memory_space<vmem>>, vector<16x1xf32>
    %39 = vector.broadcast %38 : vector<16x1xf32> to vector<16x16xf32>
    %40 = arith.addf %37, %39 : vector<16x16xf32>
    %41 = arith.addf %35, %40 : vector<16x16xf32>
    %cst_31 = arith.constant 0.000000e+00 : f32
    %42 = vector.broadcast %cst_31 : f32 to vector<16x16xf32>
    %43 = arith.maximumf %41, %42 : vector<16x16xf32>
    %c0_32 = arith.constant 0 : index
    %c0_33 = arith.constant 0 : index
    %c0_34 = arith.constant 0 : index
    %44 = vector.load %arg8[%c0_32, %c0_33, %c0_34] : memref<1x16x16xf32, #tpu.memory_space<vmem>>, vector<1x16x16xf32>
    %45 = vector.shape_cast %44 : vector<1x16x16xf32> to vector<16x16xf32>
    %46 = vector.shape_cast %43 : vector<16x16xf32> to vector<1x16x16xf32>
    tpu.vector_store %arg8[%c0_32, %c0_33, %c0_34], %46 {strides = array<i32>} : memref<1x16x16xf32, #tpu.memory_space<vmem>>, vector<1x16x16xf32>,
    return
  }
  func.func @transform_0(%arg0: i32) -> (i32, i32, i32) {
    %c0_i32 = arith.constant 0 : i32
    %c0_i32_0 = arith.constant 0 : i32
    %c0_i32_1 = arith.constant 0 : i32
    return %arg0, %c0_i32, %c0_i32_0 : i32, i32, i32
  }
  func.func @transform_1(%arg0: i32) -> (i32, i32, i32) {
    %c0_i32 = arith.constant 0 : i32
    %c0_i32_0 = arith.constant 0 : i32
    %c0_i32_1 = arith.constant 0 : i32
    %c0_i32_2 = arith.constant 0 : i32
    return %c0_i32, %c0_i32_0, %c0_i32_1 : i32, i32, i32
  }
  func.func @transform_2(%arg0: i32) -> (i32, i32) {
    %c0_i32 = arith.constant 0 : i32
    %c0_i32_0 = arith.constant 0 : i32
    %c0_i32_1 = arith.constant 0 : i32
    return %c0_i32, %c0_i32_0 : i32, i32
  }
  func.func @transform_3(%arg0: i32) -> (i32, i32, i32) {
    %c0_i32 = arith.constant 0 : i32
    %c0_i32_0 = arith.constant 0 : i32
    %c0_i32_1 = arith.constant 0 : i32
    %c0_i32_2 = arith.constant 0 : i32
    return %c0_i32, %c0_i32_0, %c0_i32_1 : i32, i32, i32
  }
  func.func @transform_4(%arg0: i32) -> (i32, i32) {
    %c0_i32 = arith.constant 0 : i32
    %c0_i32_0 = arith.constant 0 : i32
    %c0_i32_1 = arith.constant 0 : i32
    return %c0_i32, %c0_i32_0 : i32, i32
  }
  func.func @transform_5(%arg0: i32) -> (i32, i32) {
    %c0_i32 = arith.constant 0 : i32
    %c0_i32_0 = arith.constant 0 : i32
    %c0_i32_1 = arith.constant 0 : i32
    return %c0_i32, %c0_i32_0 : i32, i32
  }
  func.func @transform_6(%arg0: i32) -> (i32, i32) {
    %c0_i32 = arith.constant 0 : i32
    %c0_i32_0 = arith.constant 0 : i32
    %c0_i32_1 = arith.constant 0 : i32
    return %c0_i32, %c0_i32_0 : i32, i32
  }
  func.func @transform_7(%arg0: i32) -> (i32, i32, i32) {
    %c0_i32 = arith.constant 0 : i32
    %c0_i32_0 = arith.constant 0 : i32
    %c0_i32_1 = arith.constant 0 : i32
    return %arg0, %c0_i32, %c0_i32_0 : i32, i32, i32
  }
}

module attributes {stable_mosaic.version = 11 : i64} {
  func.func @_temporal_block_kernel(%arg0: i32, %arg1: memref<1x4x16xf32, #tpu.memory_space<vmem>>, %arg2: memref<2x8x4xf32, #tpu.memory_space<vmem>>, %arg3: memref<8x1xf32, #tpu.memory_space<vmem>>, %arg4: memref<2x8x8xf32, #tpu.memory_space<vmem>>, %arg5: memref<8x1xf32, #tpu.memory_space<vmem>>, %arg6: memref<8x4xf32, #tpu.memory_space<vmem>>, %arg7: memref<8x1xf32, #tpu.memory_space<vmem>>, %arg8: memref<1x8x16xf32, #tpu.memory_space<vmem>>) attributes {dimension_semantics = [#tpu.dimension_semantics<parallel>], iteration_bounds = array<i64: 2>, scalar_prefetch = 0 : i64, scratch_operands = 0 : i64, tpu.core_type = #tpu.core_type<tc>, window_params = [{transform_indices = @transform_0, window_bounds = array<i64: 1, 4, 16>}, {pipeline_mode = #tpu.pipeline_mode<synchronous>, transform_indices = @transform_1, window_bounds = array<i64: 2, 8, 4>}, {pipeline_mode = #tpu.pipeline_mode<synchronous>, transform_indices = @transform_2, window_bounds = array<i64: 8, 1>}, {pipeline_mode = #tpu.pipeline_mode<synchronous>, transform_indices = @transform_3, window_bounds = array<i64: 2, 8, 8>}, {pipeline_mode = #tpu.pipeline_mode<synchronous>, transform_indices = @transform_4, window_bounds = array<i64: 8, 1>}, {pipeline_mode = #tpu.pipeline_mode<synchronous>, transform_indices = @transform_5, window_bounds = array<i64: 8, 4>}, {pipeline_mode = #tpu.pipeline_mode<synchronous>, transform_indices = @transform_6, window_bounds = array<i64: 8, 1>}, {transform_indices = @transform_7, window_bounds = array<i64: 1, 8, 16>}]} {
    %c0 = arith.constant 0 : index
    %c0_0 = arith.constant 0 : index
    %c0_1 = arith.constant 0 : index
    %0 = vector.load %arg1[%c0, %c0_0, %c0_1] : memref<1x4x16xf32, #tpu.memory_space<vmem>>, vector<1x4x16xf32>
    %1 = vector.shape_cast %0 : vector<1x4x16xf32> to vector<4x16xf32>
    %cst = arith.constant 0.000000e+00 : f32
    %2 = vector.broadcast %cst : f32 to vector<8x16xf32>
    %cst_2 = arith.constant 0.000000e+00 : f32
    %3 = vector.broadcast %cst_2 : f32 to vector<4x1xf32>
    %4 = vector.extract_strided_slice %1 {offsets = [0, 0], sizes = [4, 15], strides = [1, 1]} : vector<4x16xf32> to vector<4x15xf32>
    %5 = tpu.concatenate %3, %4 in 1 : vector<4x1xf32>, vector<4x15xf32> -> vector<4x16xf32>
    %c0_3 = arith.constant 0 : index
    %c0_4 = arith.constant 0 : index
    %c0_5 = arith.constant 0 : index
    %6 = vector.load %arg2[%c0_3, %c0_4, %c0_5] : memref<2x8x4xf32, #tpu.memory_space<vmem>>, vector<1x8x4xf32>
    %7 = vector.shape_cast %6 : vector<1x8x4xf32> to vector<8x4xf32>
    %cst_6 = arith.constant dense<0.000000e+00> : vector<8x16xf32>
    %8 = tpu.matmul %7, %5, %cst_6 {dimension_numbers = #tpu.dot_dimension_numbers<[1], [0], [0], [1], [0, 0, 1, 1], [], []>} : vector<8x4xf32>, vector<4x16xf32>, vector<8x16xf32> -> vector<8x16xf32>
    %9 = arith.addf %2, %8 : vector<8x16xf32>
    %c1 = arith.constant 1 : index
    %c0_7 = arith.constant 0 : index
    %c0_8 = arith.constant 0 : index
    %10 = vector.load %arg2[%c1, %c0_7, %c0_8] : memref<2x8x4xf32, #tpu.memory_space<vmem>>, vector<1x8x4xf32>
    %11 = vector.shape_cast %10 : vector<1x8x4xf32> to vector<8x4xf32>
    %cst_9 = arith.constant dense<0.000000e+00> : vector<8x16xf32>
    %12 = tpu.matmul %11, %1, %cst_9 {dimension_numbers = #tpu.dot_dimension_numbers<[1], [0], [0], [1], [0, 0, 1, 1], [], []>} : vector<8x4xf32>, vector<4x16xf32>, vector<8x16xf32> -> vector<8x16xf32>
    %13 = arith.addf %9, %12 : vector<8x16xf32>
    %c0_10 = arith.constant 0 : index
    %c0_11 = arith.constant 0 : index
    %14 = vector.load %arg3[%c0_10, %c0_11] : memref<8x1xf32, #tpu.memory_space<vmem>>, vector<8x1xf32>
    %15 = vector.broadcast %14 : vector<8x1xf32> to vector<8x16xf32>
    %16 = arith.addf %13, %15 : vector<8x16xf32>
    %cst_12 = arith.constant 0.000000e+00 : f32
    %17 = vector.broadcast %cst_12 : f32 to vector<8x16xf32>
    %18 = arith.maximumf %16, %17 : vector<8x16xf32>
    %cst_13 = arith.constant 0.000000e+00 : f32
    %19 = vector.broadcast %cst_13 : f32 to vector<8x16xf32>
    %cst_14 = arith.constant 0.000000e+00 : f32
    %20 = vector.broadcast %cst_14 : f32 to vector<8x1xf32>
    %21 = vector.extract_strided_slice %18 {offsets = [0, 0], sizes = [8, 15], strides = [1, 1]} : vector<8x16xf32> to vector<8x15xf32>
    %22 = tpu.concatenate %20, %21 in 1 : vector<8x1xf32>, vector<8x15xf32> -> vector<8x16xf32>
    %c0_15 = arith.constant 0 : index
    %c0_16 = arith.constant 0 : index
    %c0_17 = arith.constant 0 : index
    %23 = vector.load %arg4[%c0_15, %c0_16, %c0_17] : memref<2x8x8xf32, #tpu.memory_space<vmem>>, vector<1x8x8xf32>
    %24 = vector.shape_cast %23 : vector<1x8x8xf32> to vector<8x8xf32>
    %cst_18 = arith.constant dense<0.000000e+00> : vector<8x16xf32>
    %25 = tpu.matmul %24, %22, %cst_18 {dimension_numbers = #tpu.dot_dimension_numbers<[1], [0], [0], [1], [0, 0, 1, 1], [], []>} : vector<8x8xf32>, vector<8x16xf32>, vector<8x16xf32> -> vector<8x16xf32>
    %26 = arith.addf %19, %25 : vector<8x16xf32>
    %c1_19 = arith.constant 1 : index
    %c0_20 = arith.constant 0 : index
    %c0_21 = arith.constant 0 : index
    %27 = vector.load %arg4[%c1_19, %c0_20, %c0_21] : memref<2x8x8xf32, #tpu.memory_space<vmem>>, vector<1x8x8xf32>
    %28 = vector.shape_cast %27 : vector<1x8x8xf32> to vector<8x8xf32>
    %cst_22 = arith.constant dense<0.000000e+00> : vector<8x16xf32>
    %29 = tpu.matmul %28, %18, %cst_22 {dimension_numbers = #tpu.dot_dimension_numbers<[1], [0], [0], [1], [0, 0, 1, 1], [], []>} : vector<8x8xf32>, vector<8x16xf32>, vector<8x16xf32> -> vector<8x16xf32>
    %30 = arith.addf %26, %29 : vector<8x16xf32>
    %c0_23 = arith.constant 0 : index
    %c0_24 = arith.constant 0 : index
    %31 = vector.load %arg5[%c0_23, %c0_24] : memref<8x1xf32, #tpu.memory_space<vmem>>, vector<8x1xf32>
    %32 = vector.broadcast %31 : vector<8x1xf32> to vector<8x16xf32>
    %33 = arith.addf %30, %32 : vector<8x16xf32>
    %cst_25 = arith.constant 0.000000e+00 : f32
    %34 = vector.broadcast %cst_25 : f32 to vector<8x16xf32>
    %35 = arith.maximumf %33, %34 : vector<8x16xf32>
    %c0_26 = arith.constant 0 : index
    %c0_27 = arith.constant 0 : index
    %36 = vector.load %arg6[%c0_26, %c0_27] : memref<8x4xf32, #tpu.memory_space<vmem>>, vector<8x4xf32>
    %cst_28 = arith.constant dense<0.000000e+00> : vector<8x16xf32>
    %37 = tpu.matmul %36, %1, %cst_28 {dimension_numbers = #tpu.dot_dimension_numbers<[1], [0], [0], [1], [0, 0, 1, 1], [], []>} : vector<8x4xf32>, vector<4x16xf32>, vector<8x16xf32> -> vector<8x16xf32>
    %c0_29 = arith.constant 0 : index
    %c0_30 = arith.constant 0 : index
    %38 = vector.load %arg7[%c0_29, %c0_30] : memref<8x1xf32, #tpu.memory_space<vmem>>, vector<8x1xf32>
    %39 = vector.broadcast %38 : vector<8x1xf32> to vector<8x16xf32>
    %40 = arith.addf %37, %39 : vector<8x16xf32>
    %41 = arith.addf %35, %40 : vector<8x16xf32>
    %cst_31 = arith.constant 0.000000e+00 : f32
    %42 = vector.broadcast %cst_31 : f32 to vector<8x16xf32>
    %43 = arith.maximumf %41, %42 : vector<8x16xf32>
    %c0_32 = arith.constant 0 : index
    %c0_33 = arith.constant 0 : index
    %c0_34 = arith.constant 0 : index
    %44 = vector.load %arg8[%c0_32, %c0_33, %c0_34] : memref<1x8x16xf32, #tpu.memory_space<vmem>>, vector<1x8x16xf32>
    %45 = vector.shape_cast %44 : vector<1x8x16xf32> to vector<8x16xf32>
    %46 = vector.shape_cast %43 : vector<8x16xf32> to vector<1x8x16xf32>
    tpu.vector_store %arg8[%c0_32, %c0_33, %c0_34], %46 {strides = array<i32>} : memref<1x8x16xf32, #tpu.memory_space<vmem>>, vector<1x8x16xf32>,
    return
  }
  func.func @transform_0(%arg0: i32) -> (i32, i32, i32) {
    %c0_i32 = arith.constant 0 : i32
    %c0_i32_0 = arith.constant 0 : i32
    %c0_i32_1 = arith.constant 0 : i32
    return %arg0, %c0_i32, %c0_i32_0 : i32, i32, i32
  }
  func.func @transform_1(%arg0: i32) -> (i32, i32, i32) {
    %c0_i32 = arith.constant 0 : i32
    %c0_i32_0 = arith.constant 0 : i32
    %c0_i32_1 = arith.constant 0 : i32
    %c0_i32_2 = arith.constant 0 : i32
    return %c0_i32, %c0_i32_0, %c0_i32_1 : i32, i32, i32
  }
  func.func @transform_2(%arg0: i32) -> (i32, i32) {
    %c0_i32 = arith.constant 0 : i32
    %c0_i32_0 = arith.constant 0 : i32
    %c0_i32_1 = arith.constant 0 : i32
    return %c0_i32, %c0_i32_0 : i32, i32
  }
  func.func @transform_3(%arg0: i32) -> (i32, i32, i32) {
    %c0_i32 = arith.constant 0 : i32
    %c0_i32_0 = arith.constant 0 : i32
    %c0_i32_1 = arith.constant 0 : i32
    %c0_i32_2 = arith.constant 0 : i32
    return %c0_i32, %c0_i32_0, %c0_i32_1 : i32, i32, i32
  }
  func.func @transform_4(%arg0: i32) -> (i32, i32) {
    %c0_i32 = arith.constant 0 : i32
    %c0_i32_0 = arith.constant 0 : i32
    %c0_i32_1 = arith.constant 0 : i32
    return %c0_i32, %c0_i32_0 : i32, i32
  }
  func.func @transform_5(%arg0: i32) -> (i32, i32) {
    %c0_i32 = arith.constant 0 : i32
    %c0_i32_0 = arith.constant 0 : i32
    %c0_i32_1 = arith.constant 0 : i32
    return %c0_i32, %c0_i32_0 : i32, i32
  }
  func.func @transform_6(%arg0: i32) -> (i32, i32) {
    %c0_i32 = arith.constant 0 : i32
    %c0_i32_0 = arith.constant 0 : i32
    %c0_i32_1 = arith.constant 0 : i32
    return %c0_i32, %c0_i32_0 : i32, i32
  }
  func.func @transform_7(%arg0: i32) -> (i32, i32, i32) {
    %c0_i32 = arith.constant 0 : i32
    %c0_i32_0 = arith.constant 0 : i32
    %c0_i32_1 = arith.constant 0 : i32
    return %arg0, %c0_i32, %c0_i32_0 : i32, i32, i32
  }
}

module attributes {stable_mosaic.version = 11 : i64} {
  func.func @_temporal_block_kernel(%arg0: i32, %arg1: memref<1x8x16xf32, #tpu.memory_space<vmem>>, %arg2: memref<2x8x8xf32, #tpu.memory_space<vmem>>, %arg3: memref<8x1xf32, #tpu.memory_space<vmem>>, %arg4: memref<2x8x8xf32, #tpu.memory_space<vmem>>, %arg5: memref<8x1xf32, #tpu.memory_space<vmem>>, %arg6: memref<1x8x16xf32, #tpu.memory_space<vmem>>) attributes {dimension_semantics = [#tpu.dimension_semantics<parallel>], iteration_bounds = array<i64: 2>, scalar_prefetch = 0 : i64, scratch_operands = 0 : i64, tpu.core_type = #tpu.core_type<tc>, window_params = [{transform_indices = @transform_0, window_bounds = array<i64: 1, 8, 16>}, {pipeline_mode = #tpu.pipeline_mode<synchronous>, transform_indices = @transform_1, window_bounds = array<i64: 2, 8, 8>}, {pipeline_mode = #tpu.pipeline_mode<synchronous>, transform_indices = @transform_2, window_bounds = array<i64: 8, 1>}, {pipeline_mode = #tpu.pipeline_mode<synchronous>, transform_indices = @transform_3, window_bounds = array<i64: 2, 8, 8>}, {pipeline_mode = #tpu.pipeline_mode<synchronous>, transform_indices = @transform_4, window_bounds = array<i64: 8, 1>}, {transform_indices = @transform_5, window_bounds = array<i64: 1, 8, 16>}]} {
    %c0 = arith.constant 0 : index
    %c0_0 = arith.constant 0 : index
    %c0_1 = arith.constant 0 : index
    %0 = vector.load %arg1[%c0, %c0_0, %c0_1] : memref<1x8x16xf32, #tpu.memory_space<vmem>>, vector<1x8x16xf32>
    %1 = vector.shape_cast %0 : vector<1x8x16xf32> to vector<8x16xf32>
    %cst = arith.constant 0.000000e+00 : f32
    %2 = vector.broadcast %cst : f32 to vector<8x16xf32>
    %cst_2 = arith.constant 0.000000e+00 : f32
    %3 = vector.broadcast %cst_2 : f32 to vector<8x2xf32>
    %4 = vector.extract_strided_slice %1 {offsets = [0, 0], sizes = [8, 14], strides = [1, 1]} : vector<8x16xf32> to vector<8x14xf32>
    %5 = tpu.concatenate %3, %4 in 1 : vector<8x2xf32>, vector<8x14xf32> -> vector<8x16xf32>
    %c0_3 = arith.constant 0 : index
    %c0_4 = arith.constant 0 : index
    %c0_5 = arith.constant 0 : index
    %6 = vector.load %arg2[%c0_3, %c0_4, %c0_5] : memref<2x8x8xf32, #tpu.memory_space<vmem>>, vector<1x8x8xf32>
    %7 = vector.shape_cast %6 : vector<1x8x8xf32> to vector<8x8xf32>
    %cst_6 = arith.constant dense<0.000000e+00> : vector<8x16xf32>
    %8 = tpu.matmul %7, %5, %cst_6 {dimension_numbers = #tpu.dot_dimension_numbers<[1], [0], [0], [1], [0, 0, 1, 1], [], []>} : vector<8x8xf32>, vector<8x16xf32>, vector<8x16xf32> -> vector<8x16xf32>
    %9 = arith.addf %2, %8 : vector<8x16xf32>
    %c1 = arith.constant 1 : index
    %c0_7 = arith.constant 0 : index
    %c0_8 = arith.constant 0 : index
    %10 = vector.load %arg2[%c1, %c0_7, %c0_8] : memref<2x8x8xf32, #tpu.memory_space<vmem>>, vector<1x8x8xf32>
    %11 = vector.shape_cast %10 : vector<1x8x8xf32> to vector<8x8xf32>
    %cst_9 = arith.constant dense<0.000000e+00> : vector<8x16xf32>
    %12 = tpu.matmul %11, %1, %cst_9 {dimension_numbers = #tpu.dot_dimension_numbers<[1], [0], [0], [1], [0, 0, 1, 1], [], []>} : vector<8x8xf32>, vector<8x16xf32>, vector<8x16xf32> -> vector<8x16xf32>
    %13 = arith.addf %9, %12 : vector<8x16xf32>
    %c0_10 = arith.constant 0 : index
    %c0_11 = arith.constant 0 : index
    %14 = vector.load %arg3[%c0_10, %c0_11] : memref<8x1xf32, #tpu.memory_space<vmem>>, vector<8x1xf32>
    %15 = vector.broadcast %14 : vector<8x1xf32> to vector<8x16xf32>
    %16 = arith.addf %13, %15 : vector<8x16xf32>
    %cst_12 = arith.constant 0.000000e+00 : f32
    %17 = vector.broadcast %cst_12 : f32 to vector<8x16xf32>
    %18 = arith.maximumf %16, %17 : vector<8x16xf32>
    %cst_13 = arith.constant 0.000000e+00 : f32
    %19 = vector.broadcast %cst_13 : f32 to vector<8x16xf32>
    %cst_14 = arith.constant 0.000000e+00 : f32
    %20 = vector.broadcast %cst_14 : f32 to vector<8x2xf32>
    %21 = vector.extract_strided_slice %18 {offsets = [0, 0], sizes = [8, 14], strides = [1, 1]} : vector<8x16xf32> to vector<8x14xf32>
    %22 = tpu.concatenate %20, %21 in 1 : vector<8x2xf32>, vector<8x14xf32> -> vector<8x16xf32>
    %c0_15 = arith.constant 0 : index
    %c0_16 = arith.constant 0 : index
    %c0_17 = arith.constant 0 : index
    %23 = vector.load %arg4[%c0_15, %c0_16, %c0_17] : memref<2x8x8xf32, #tpu.memory_space<vmem>>, vector<1x8x8xf32>
    %24 = vector.shape_cast %23 : vector<1x8x8xf32> to vector<8x8xf32>
    %cst_18 = arith.constant dense<0.000000e+00> : vector<8x16xf32>
    %25 = tpu.matmul %24, %22, %cst_18 {dimension_numbers = #tpu.dot_dimension_numbers<[1], [0], [0], [1], [0, 0, 1, 1], [], []>} : vector<8x8xf32>, vector<8x16xf32>, vector<8x16xf32> -> vector<8x16xf32>
    %26 = arith.addf %19, %25 : vector<8x16xf32>
    %c1_19 = arith.constant 1 : index
    %c0_20 = arith.constant 0 : index
    %c0_21 = arith.constant 0 : index
    %27 = vector.load %arg4[%c1_19, %c0_20, %c0_21] : memref<2x8x8xf32, #tpu.memory_space<vmem>>, vector<1x8x8xf32>
    %28 = vector.shape_cast %27 : vector<1x8x8xf32> to vector<8x8xf32>
    %cst_22 = arith.constant dense<0.000000e+00> : vector<8x16xf32>
    %29 = tpu.matmul %28, %18, %cst_22 {dimension_numbers = #tpu.dot_dimension_numbers<[1], [0], [0], [1], [0, 0, 1, 1], [], []>} : vector<8x8xf32>, vector<8x16xf32>, vector<8x16xf32> -> vector<8x16xf32>
    %30 = arith.addf %26, %29 : vector<8x16xf32>
    %c0_23 = arith.constant 0 : index
    %c0_24 = arith.constant 0 : index
    %31 = vector.load %arg5[%c0_23, %c0_24] : memref<8x1xf32, #tpu.memory_space<vmem>>, vector<8x1xf32>
    %32 = vector.broadcast %31 : vector<8x1xf32> to vector<8x16xf32>
    %33 = arith.addf %30, %32 : vector<8x16xf32>
    %cst_25 = arith.constant 0.000000e+00 : f32
    %34 = vector.broadcast %cst_25 : f32 to vector<8x16xf32>
    %35 = arith.maximumf %33, %34 : vector<8x16xf32>
    %36 = arith.addf %35, %1 : vector<8x16xf32>
    %cst_26 = arith.constant 0.000000e+00 : f32
    %37 = vector.broadcast %cst_26 : f32 to vector<8x16xf32>
    %38 = arith.maximumf %36, %37 : vector<8x16xf32>
    %c0_27 = arith.constant 0 : index
    %c0_28 = arith.constant 0 : index
    %c0_29 = arith.constant 0 : index
    %39 = vector.load %arg6[%c0_27, %c0_28, %c0_29] : memref<1x8x16xf32, #tpu.memory_space<vmem>>, vector<1x8x16xf32>
    %40 = vector.shape_cast %39 : vector<1x8x16xf32> to vector<8x16xf32>
    %41 = vector.shape_cast %38 : vector<8x16xf32> to vector<1x8x16xf32>
    tpu.vector_store %arg6[%c0_27, %c0_28, %c0_29], %41 {strides = array<i32>} : memref<1x8x16xf32, #tpu.memory_space<vmem>>, vector<1x8x16xf32>,
    return
  }
  func.func @transform_0(%arg0: i32) -> (i32, i32, i32) {
    %c0_i32 = arith.constant 0 : i32
    %c0_i32_0 = arith.constant 0 : i32
    %c0_i32_1 = arith.constant 0 : i32
    return %arg0, %c0_i32, %c0_i32_0 : i32, i32, i32
  }
  func.func @transform_1(%arg0: i32) -> (i32, i32, i32) {
    %c0_i32 = arith.constant 0 : i32
    %c0_i32_0 = arith.constant 0 : i32
    %c0_i32_1 = arith.constant 0 : i32
    %c0_i32_2 = arith.constant 0 : i32
    return %c0_i32, %c0_i32_0, %c0_i32_1 : i32, i32, i32
  }
  func.func @transform_2(%arg0: i32) -> (i32, i32) {
    %c0_i32 = arith.constant 0 : i32
    %c0_i32_0 = arith.constant 0 : i32
    %c0_i32_1 = arith.constant 0 : i32
    return %c0_i32, %c0_i32_0 : i32, i32
  }
  func.func @transform_3(%arg0: i32) -> (i32, i32, i32) {
    %c0_i32 = arith.constant 0 : i32
    %c0_i32_0 = arith.constant 0 : i32
    %c0_i32_1 = arith.constant 0 : i32
    %c0_i32_2 = arith.constant 0 : i32
    return %c0_i32, %c0_i32_0, %c0_i32_1 : i32, i32, i32
  }
  func.func @transform_4(%arg0: i32) -> (i32, i32) {
    %c0_i32 = arith.constant 0 : i32
    %c0_i32_0 = arith.constant 0 : i32
    %c0_i32_1 = arith.constant 0 : i32
    return %c0_i32, %c0_i32_0 : i32, i32
  }
  func.func @transform_5(%arg0: i32) -> (i32, i32, i32) {
    %c0_i32 = arith.constant 0 : i32
    %c0_i32_0 = arith.constant 0 : i32
    %c0_i32_1 = arith.constant 0 : i32
    return %arg0, %c0_i32, %c0_i32_0 : i32, i32, i32
  }
}

</mosaic_0001>

<llo_original>
// kernel: _lambda_.3
$region0: #{_lambda_.3}
  #allocation0 [shape = 'u32[]', space=smem, size = 0x4, offset = 0x4, fixed_abs, tag = 'smem constant byte address 0x4 - core index']
  #allocation1 [shape = 'u32[144,128]{1,0:T(1,128)}', space=vmem, size = 0x12000, scoped, tag = 'internal scratch']
  %s0 = inlined_call_operand.hbm [shape: f32[2,4,16], index: 0, kind: input, shape index: {}]
  %s1 = inlined_call_operand.vmem [shape: f32[2,8,4], index: 1, kind: input, shape index: {}]
  %s2 = inlined_call_operand.vmem [shape: f32[8,1], index: 2, kind: input, shape index: {}]
  %s3 = inlined_call_operand.vmem [shape: f32[2,8,8], index: 3, kind: input, shape index: {}]
  %s4 = inlined_call_operand.hbm [shape: f32[8,1], index: 4, kind: input, shape index: {}]
  %s5 = inlined_call_operand.vmem [shape: f32[8,4], index: 5, kind: input, shape index: {}]
  %s6 = inlined_call_operand.hbm [shape: f32[8,1], index: 6, kind: input, shape index: {}]
  %s7 = inlined_call_operand.vmem [shape: f32[2,8,16], index: 7, kind: output, shape index: {}]
  %s8 = sld [smem:[#allocation0]]
  $region73: #{_lambda_.3} parent=0
    _
  %s10 = ssub.s32 1, %s8
  %s11 = scalar_select 0, %s10, %s8
  $region1: #{_lambda_.3} parent=0
    #allocation2 [shape = 'u8[4096]{0}', space=vmem, size = 0x1000, scoped, tag = 'input window, operand 0']
    #allocation3 [shape = 's32[2]{0}', space=sflag, size = 0x8, scoped, tag = 'scoped memory for _lambda_.3']
    #allocation4 [shape = 'u8[4096]{0}', space=vmem, size = 0x1000, scoped, tag = 'input window, operand 4, single buffered']
    #allocation5 [shape = 's32[1]{0}', space=sflag, size = 0x4, scoped, tag = 'scoped memory for _lambda_.3']
    #allocation6 [shape = 'u8[4096]{0}', space=vmem, size = 0x1000, scoped, tag = 'input window, operand 6, single buffered']
    %12 = vsyncpa [#allocation3], 0
    %s13 = scalar_lea.sflag [#allocation3], 1
    %14 = vsyncpa %s13, 0
    %15 = vsyncpa [#allocation5], 0
    loop: start=0, step=1, limit=4
    $region2: #{_lambda_.3} parent=1 // loop_pre_header
      _
    $region3: #{_lambda_.3} parent=1 // loop_header
      %s17 = sphi 0, %s21
      %p18 = scmp.ge.s32.totalorder %s17, 4
      %s27 = sphi 0, %s29
      %s30 = sphi 0, %s27
      %s31 = sphi 0, %s30
      %s47 = sphi 0, %s31
      %s51 = sphi 0, %s51
      %s53 = sphi 0, %s51
      %s54 = sphi 0, %s53
      %s68 = sphi 0, %s54
      %s72 = sphi 0, %s72
      %s74 = sphi 0, %s72
      %s75 = sphi 0, %s74
      %s89 = sphi 0, %s75
      %s93 = sphi 0, %s93
      %s95 = sphi 0, %s93
      %s96 = sphi 0, %s95
      %s110 = sphi 0, %s96
      %s114 = sphi 0, %s114
      %s116 = sphi 0, %s114
      %s117 = sphi 0, %s116
      %s131 = sphi 0, %s117
      %s135 = sphi 0, %s135
      %s137 = sphi 0, %s135
      %s138 = sphi 0, %s137
      %s152 = sphi 0, %s138
      %s156 = sphi 0, %s156
      %s158 = sphi 0, %s156
      %s159 = sphi 0, %s158
      %s173 = sphi 0, %s159
      %s179 = sphi 0, %s181
      %s182 = sphi 0, %s179
      %s183 = sphi 0, %s182
      %s199 = sphi 0, %s183
    $region4: #{_lambda_.3} parent=1 // loop_header_branch
      %20 = sbr.rel (%p18) target = $region8
    $region5: #{_lambda_.3} parent=1 // loop_body
      %s22 = ssub.s32 %s17, 1
      %s23 = ssub.s32 %s17, 2
      %s24 = sadd.s32 %s17, 1
      %s25 = ssub.s32 %s17, %s24
      %p26 = scmp.eq.s32.totalorder %s25, 0
      %s28 = sadd.s32 %s27, 1
      %s29 = scalar_select %p26, %s27, %s28
      %p32 = pneg %p26
      %p33 = scmp.eq.s32.totalorder %s17, 1
      %p34 = por %p32, %p33
      %p35 = scmp.ne.s32.totalorder %s27, %s30
      %p36 = scmp.eq.s32.totalorder %s17, 0
      %p37 = por %p35, %p36
      %p38 = scmp.ne.s32.totalorder %s27, %s30
      %p39 = scmp.eq.s32.totalorder %s22, 1
      %p40 = por %p38, %p39
      %p41 = scmp.ne.s32.totalorder %s30, %s31
      %p42 = scmp.eq.s32.totalorder %s22, 0
      %p43 = por %p41, %p42
      %p44 = scmp.ne.s32.totalorder %s30, %s31
      %p45 = scmp.eq.s32.totalorder %s23, 1
      %p46 = por %p44, %p45
      %p48 = scmp.ne.s32.totalorder %s31, %s47
      %p49 = scmp.eq.s32.totalorder %s23, 0
      %p50 = por %p48, %p49
      %s52 = sadd.s32 %s51, 1
      %p55 = scmp.eq.s32.totalorder %s17, 1
      %p56 = scmp.ne.s32.totalorder %s51, %s53
      %p57 = scmp.eq.s32.totalorder %s17, 0
      %p58 = por %p56, %p57
      %p59 = scmp.ne.s32.totalorder %s51, %s53
      %p60 = scmp.eq.s32.totalorder %s22, 1
      %p61 = por %p59, %p60
      %p62 = scmp.ne.s32.totalorder %s53, %s54
      %p63 = scmp.eq.s32.totalorder %s22, 0
      %p64 = por %p62, %p63
      %p65 = scmp.ne.s32.totalorder %s53, %s54
      %p66 = scmp.eq.s32.totalorder %s23, 1
      %p67 = por %p65, %p66
      %p69 = scmp.ne.s32.totalorder %s54, %s68
      %p70 = scmp.eq.s32.totalorder %s23, 0
      %p71 = por %p69, %p70
      %s73 = sadd.s32 %s72, 1
      %p76 = scmp.eq.s32.totalorder %s17, 1
      %p77 = scmp.ne.s32.totalorder %s72, %s74
      %p78 = scmp.eq.s32.totalorder %s17, 0
      %p79 = por %p77, %p78
      %p80 = scmp.ne.s32.totalorder %s72, %s74
      %p81 = scmp.eq.s32.totalorder %s22, 1
      %p82 = por %p80, %p81
      %p83 = scmp.ne.s32.totalorder %s74, %s75
      %p84 = scmp.eq.s32.totalorder %s22, 0
      %p85 = por %p83, %p84
      %p86 = scmp.ne.s32.totalorder %s74, %s75
      %p87 = scmp.eq.s32.totalorder %s23, 1
      %p88 = por %p86, %p87
      %p90 = scmp.ne.s32.totalorder %s75, %s89
      %p91 = scmp.eq.s32.totalorder %s23, 0
      %p92 = por %p90, %p91
      %s94 = sadd.s32 %s93, 1
      %p97 = scmp.eq.s32.totalorder %s17, 1
      %p98 = scmp.ne.s32.totalorder %s93, %s95
      %p99 = scmp.eq.s32.totalorder %s17, 0
      %p100 = por %p98, %p99
      %p101 = scmp.ne.s32.totalorder %s93, %s95
      %p102 = scmp.eq.s32.totalorder %s22, 1
      %p103 = por %p101, %p102
      %p104 = scmp.ne.s32.totalorder %s95, %s96
      %p105 = scmp.eq.s32.totalorder %s22, 0
      %p106 = por %p104, %p105
      %p107 = scmp.ne.s32.totalorder %s95, %s96
      %p108 = scmp.eq.s32.totalorder %s23, 1
      %p109 = por %p107, %p108
      %p111 = scmp.ne.s32.totalorder %s96, %s110
      %p112 = scmp.eq.s32.totalorder %s23, 0
      %p113 = por %p111, %p112
      %s115 = sadd.s32 %s114, 1
      %p118 = scmp.eq.s32.totalorder %s17, 1
      %p119 = scmp.ne.s32.totalorder %s114, %s116
      %p120 = scmp.eq.s32.totalorder %s17, 0
      %p121 = por %p119, %p120
      %p122 = scmp.ne.s32.totalorder %s114, %s116
      %p123 = scmp.eq.s32.totalorder %s22, 1
      %p124 = por %p122, %p123
      %p125 = scmp.ne.s32.totalorder %s116, %s117
      %p126 = scmp.eq.s32.totalorder %s22, 0
      %p127 = por %p125, %p126
      %p128 = scmp.ne.s32.totalorder %s116, %s117
      %p129 = scmp.eq.s32.totalorder %s23, 1
      %p130 = por %p128, %p129
      %p132 = scmp.ne.s32.totalorder %s117, %s131
      %p133 = scmp.eq.s32.totalorder %s23, 0
      %p134 = por %p132, %p133
      %s136 = sadd.s32 %s135, 1
      %p139 = scmp.eq.s32.totalorder %s17, 1
      %p140 = scmp.ne.s32.totalorder %s135, %s137
      %p141 = scmp.eq.s32.totalorder %s17, 0
      %p142 = por %p140, %p141
      %p143 = scmp.ne.s32.totalorder %s135, %s137
      %p144 = scmp.eq.s32.totalorder %s22, 1
      %p145 = por %p143, %p144
      %p146 = scmp.ne.s32.totalorder %s137, %s138
      %p147 = scmp.eq.s32.totalorder %s22, 0
      %p148 = por %p146, %p147
      %p149 = scmp.ne.s32.totalorder %s137, %s138
      %p150 = scmp.eq.s32.totalorder %s23, 1
      %p151 = por %p149, %p150
      %p153 = scmp.ne.s32.totalorder %s138, %s152
      %p154 = scmp.eq.s32.totalorder %s23, 0
      %p155 = por %p153, %p154
      %s157 = sadd.s32 %s156, 1
      %p160 = scmp.eq.s32.totalorder %s17, 1
      %p161 = scmp.ne.s32.totalorder %s156, %s158
      %p162 = scmp.eq.s32.totalorder %s17, 0
      %p163 = por %p161, %p162
      %p164 = scmp.ne.s32.totalorder %s156, %s158
      %p165 = scmp.eq.s32.totalorder %s22, 1
      %p166 = por %p164, %p165
      %p167 = scmp.ne.s32.totalorder %s158, %s159
      %p168 = scmp.eq.s32.totalorder %s22, 0
      %p169 = por %p167, %p168
      %p170 = scmp.ne.s32.totalorder %s158, %s159
      %p171 = scmp.eq.s32.totalorder %s23, 1
      %p172 = por %p170, %p171
      %p174 = scmp.ne.s32.totalorder %s159, %s173
      %p175 = scmp.eq.s32.totalorder %s23, 0
      %p176 = por %p174, %p175
      %s177 = ssub.s32 %s17, %s24
      %p178 = scmp.eq.s32.totalorder %s177, 0
      %s180 = sadd.s32 %s179, 1
      %s181 = scalar_select %p178, %s179, %s180
      %p184 = pneg %p178
      %p185 = scmp.eq.s32.totalorder %s17, 1
      %p186 = por %p184, %p185
      %p187 = scmp.ne.s32.totalorder %s179, %s182
      %p188 = scmp.eq.s32.totalorder %s17, 0
      %p189 = por %p187, %p188
      %p190 = scmp.ne.s32.totalorder %s179, %s182
      %p191 = scmp.eq.s32.totalorder %s22, 1
      %p192 = por %p190, %p191
      %p193 = scmp.ne.s32.totalorder %s182, %s183
      %p194 = scmp.eq.s32.totalorder %s22, 0
      %p195 = por %p193, %p194
      %p196 = scmp.ne.s32.totalorder %s182, %s183
      %p197 = scmp.eq.s32.totalorder %s23, 1
      %p198 = por %p196, %p197
      %p200 = scmp.ne.s32.totalorder %s183, %s199
      %p201 = scmp.eq.s32.totalorder %s23, 0
      %p202 = por %p200, %p201
      %p203 = scmp.le.s32.totalorder 1, %s17
      %p204 = scmp.lt.s32.totalorder %s17, 3
      %p205 = pnand %p203, %p204
      %p206 = pneg %p205
      // Predicated region
      $region9: #{_lambda_.3} parent=5 // pred_check
        _
      $region10: #{_lambda_.3} parent=5 // pred_check_branch
        %208 = sbr.rel (%p205) target = $region12
      $region11: #{_lambda_.3} parent=5 // pred_region
        %s209 = ssub.s32 %s17, 1
        // Predicated region
        $region13: #{_lambda_.3} parent=11 // pred_check
          %p210 = pneg %p64
        $region14: #{_lambda_.3} parent=11 // pred_check_branch
          %212 = sbr.rel (%p210) target = $region16
        $region15: #{_lambda_.3} parent=11 // pred_region
          _
        $region16: #{_lambda_.3} parent=11 // pred_fallthru
          _
        // Predicated region
        $region17: #{_lambda_.3} parent=11 // pred_check
          %p213 = pneg %p85
        $region18: #{_lambda_.3} parent=11 // pred_check_branch
          %215 = sbr.rel (%p213) target = $region20
        $region19: #{_lambda_.3} parent=11 // pred_region
          _
        $region20: #{_lambda_.3} parent=11 // pred_fallthru
          _
        // Predicated region
        $region21: #{_lambda_.3} parent=11 // pred_check
          %p216 = pneg %p106
        $region22: #{_lambda_.3} parent=11 // pred_check_branch
          %218 = sbr.rel (%p216) target = $region24
        $region23: #{_lambda_.3} parent=11 // pred_region
          _
        $region24: #{_lambda_.3} parent=11 // pred_fallthru
          _
        // Predicated region
        $region25: #{_lambda_.3} parent=11 // pred_check
          %p219 = pneg %p127
        $region26: #{_lambda_.3} parent=11 // pred_check_branch
          %221 = sbr.rel (%p219) target = $region28
        $region27: #{_lambda_.3} parent=11 // pred_region
          %s223 = ssub.s32 128, 128
          %224 = vsyncadd [#allocation5], %s223
          %s226 = sshll.u32 [#allocation4], 4
          %s227 = int_to_ptr.vmem [resolvable:$true] %s226
          %229 = dma.hbm_to_vmem [thread:$0]  %s4, 128, %s227, [#allocation5]
        $region28: #{_lambda_.3} parent=11 // pred_fallthru
          _
        // Predicated region
        $region29: #{_lambda_.3} parent=11 // pred_check
          %p230 = pneg %p148
        $region30: #{_lambda_.3} parent=11 // pred_check_branch
          %232 = sbr.rel (%p230) target = $region32
        $region31: #{_lambda_.3} parent=11 // pred_region
          _
        $region32: #{_lambda_.3} parent=11 // pred_fallthru
          _
        // Predicated region
        $region33: #{_lambda_.3} parent=11 // pred_check
          %p233 = pneg %p169
        $region34: #{_lambda_.3} parent=11 // pred_check_branch
          %235 = sbr.rel (%p233) target = $region36
        $region35: #{_lambda_.3} parent=11 // pred_region
          %s237 = ssub.s32 128, 128
          %238 = vsyncadd [#allocation5], %s237
          %s240 = sshll.u32 [#allocation6], 4
          %s241 = int_to_ptr.vmem [resolvable:$true] %s240
          %243 = dma.hbm_to_vmem [thread:$0]  %s6, 128, %s241, [#allocation5]
        $region36: #{_lambda_.3} parent=11 // pred_fallthru
          _
      $region12: #{_lambda_.3} parent=5 // pred_fallthru
        _
      %p244 = scmp.lt.s32.totalorder %s17, 2
      // Predicated region
      $region37: #{_lambda_.3} parent=5 // pred_check
        %p245 = pneg %p244
      $region38: #{_lambda_.3} parent=5 // pred_check_branch
        %247 = sbr.rel (%p245) target = $region40
      $region39: #{_lambda_.3} parent=5 // pred_region
        // Predicated region
        $region41: #{_lambda_.3} parent=39 // pred_check
          %p248 = pneg %p37
        $region42: #{_lambda_.3} parent=39 // pred_check_branch
          %250 = sbr.rel (%p248) target = $region44
        $region43: #{_lambda_.3} parent=39 // pred_region
          %s251 = sand.u32 %s27, 1
          %s252 = scalar_lea.sflag [#allocation3], %s251
          %s253 = sand.u32 %s27, 1
          %s254 = smul.addr %s253, 4
          %s255 = scalar_lea.vmem [#allocation2], %s254
          %s257 = ssub.s32 64, 64
          %258 = vsyncadd %s252, %s257
          %s259 = smul.addr %s17, 64
          %s260 = scalar_lea.hbm %s0, %s259
          %s262 = sshll.u32 %s255, 4
          %s263 = int_to_ptr.vmem [resolvable:$true] %s262
          %265 = dma.hbm_to_vmem [thread:$0]  %s260, 64, %s263, %s252
        $region44: #{_lambda_.3} parent=39 // pred_fallthru
          _
      $region40: #{_lambda_.3} parent=5 // pred_fallthru
        _
      %p266 = scmp.le.s32.totalorder 1, %s17
      %p267 = scmp.lt.s32.totalorder %s17, 3
      %p268 = pnand %p266, %p267
      %p269 = pneg %p268
      // Predicated region
      $region45: #{_lambda_.3} parent=5 // pred_check
        _
      $region46: #{_lambda_.3} parent=5 // pred_check_branch
        %271 = sbr.rel (%p268) target = $region48
      $region47: #{_lambda_.3} parent=5 // pred_region
        %s272 = ssub.s32 %s17, 1
        %s273 = sand.u32 %s30, 1
        %s274 = scalar_lea.sflag [#allocation3], %s273
        %s275 = sand.u32 %s30, 1
        %s276 = smul.addr %s275, 4
        %s277 = scalar_lea.vmem [#allocation2], %s276
        // Predicated region
        $region49: #{_lambda_.3} parent=47 // pred_check
          %p278 = pneg %p43
        $region50: #{_lambda_.3} parent=47 // pred_check_branch
          %280 = sbr.rel (%p278) target = $region52
        $region51: #{_lambda_.3} parent=47 // pred_region
          %281 = dma.done %s274, 64
        $region52: #{_lambda_.3} parent=47 // pred_fallthru
          _
        // Predicated region
        $region53: #{_lambda_.3} parent=47 // pred_check
          %p282 = pneg %p127
        $region54: #{_lambda_.3} parent=47 // pred_check_branch
          %284 = sbr.rel (%p282) target = $region56
        $region55: #{_lambda_.3} parent=47 // pred_region
          %285 = dma.done [#allocation5], 128
        $region56: #{_lambda_.3} parent=47 // pred_fallthru
          _
        // Predicated region
        $region57: #{_lambda_.3} parent=47 // pred_check
          %p286 = pneg %p169
        $region58: #{_lambda_.3} parent=47 // pred_check_branch
          %288 = sbr.rel (%p286) target = $region60
        $region59: #{_lambda_.3} parent=47 // pred_region
          %289 = dma.done [#allocation5], 128
        $region60: #{_lambda_.3} parent=47 // pred_fallthru
          _
        %s290 = sand.u32 %s30, 1
        %s291 = scalar_lea.sflag [#allocation3], %s290
        %s292 = sand.u32 %s30, 1
        %s293 = smul.addr %s292, 4
        %s294 = scalar_lea.vmem [#allocation2], %s293
        %p295 = pneg %p43
        %p296 = pneg %p40
        %p297 = pneg %p64
        %p298 = pneg %p61
        %p299 = pneg %p85
        %p300 = pneg %p82
        %p301 = pneg %p106
        %p302 = pneg %p103
        %p303 = pneg %p127
        %p304 = pneg %p124
        %p305 = pneg %p148
        %p306 = pneg %p145
        %p307 = pneg %p169
        %p308 = pneg %p166
        %p309 = pneg %p195
        %p310 = pneg %p192
        %p311 = scmp.lt.s32.totalorder %s22, 1
        %s312 = scalar_select %p311, %s22, 1
        %s313 = smul.addr %s312, 8
        %s314 = scalar_lea.vmem %s7, %s313
        %p315 = scmp.lt.s32.totalorder %s22, 1
        %s316 = scalar_select %p315, %s22, 1
        %s317 = smul.addr %s316, 8
        %s318 = scalar_lea.vmem %s7, %s317
        %v319 = vld [vmem:[%s277] sm:$0xf]
        %321 = vrot.lane.b32.xlu0 %v319, 1
        %v322 = vpop.permute.xlu0 %321
        %vm324 = vcmask 7168
        %v325 = vsel %vm324, 0.0, %v322
        %v326 = vld [vmem:[%s1] sm:$0xff]
        %s327 = scalar_lea.vmem %s1, 8
        %v328 = vld [vmem:[%s327] sm:$0xff]
        %vm329 = vcmask 31744
        %v331 = vsel %vm329, %v328, 0
        %vm333 = vcmask 1043456
        %v334 = vsel %vm333, %v319, 0
        %336 = vmatprep.subr.mxu0 0.0
        %337 = vmatpush1.msra.mxu0 %v334
        %338 = vmatprep.subr.mxu0 0.0
        %339 = vmatpush1.msra.mxu0 0.0
        %340 = vmatprep.subr.mxu0 0.0
        %341 = vmatpush1.msra.mxu0 0.0
        %342 = vmatprep.subr.mxu0 0.0
        %343 = vmatpush1.msra.mxu0 0.0
        %344 = vmatprep.subr.mxu0 0.0
        %345 = vmatpush1.msra.mxu0 0.0
        %346 = vmatprep.subr.mxu0 0.0
        %347 = vmatpush1.msra.mxu0 0.0
        %348 = vmatprep.subr.mxu0 0.0
        %349 = vmatpush1.msra.mxu0 0.0
        %350 = vmatprep.subr.mxu0 0.0
        %351 = vmatpush1.msra.mxu0 0.0
        %352 = vmatprep.subr.mxu0 0.0
        %353 = vmatpush1.msra.mxu0 0.0
        %354 = vmatprep.subr.mxu0 0.0
        %355 = vmatpush1.msra.mxu0 0.0
        %356 = vmatprep.subr.mxu0 0.0
        %357 = vmatpush1.msra.mxu0 0.0
        %358 = vmatprep.subr.mxu0 0.0
        %359 = vmatpush1.msra.mxu0 0.0
        %360 = vmatprep.subr.mxu0 0.0
        %361 = vmatpush1.msra.mxu0 0.0
        %362 = vmatprep.subr.mxu0 0.0
        %363 = vmatpush1.msra.mxu0 0.0
        %364 = vmatprep.subr.mxu0 0.0
        %365 = vmatpush1.msra.mxu0 0.0
        %366 = vmatprep.subr.mxu0 0.0
        %367 = vmatpush1.msra.mxu0 0.0
        %368 = vmatprep.subr.mxu0 0.0
        %369 = vmatpush1.msra.mxu0 0.0
        %370 = vmatprep.subr.mxu0 0.0
        %371 = vmatpush1.msra.mxu0 0.0
        %372 = vmatprep.subr.mxu0 0.0
        %373 = vmatpush1.msra.mxu0 0.0
        %374 = vmatprep.subr.mxu0 0.0
        %375 = vmatpush1.msra.mxu0 0.0
        %376 = vmatprep.subr.mxu0 0.0
        %377 = vmatpush1.msra.mxu0 0.0
        %378 = vmatprep.subr.mxu0 0.0
        %379 = vmatpush1.msra.mxu0 0.0
        %380 = vmatprep.subr.mxu0 0.0
        %381 = vmatpush1.msra.mxu0 0.0
        %382 = vmatprep.subr.mxu0 0.0
        %383 = vmatpush1.msra.mxu0 0.0
        %384 = vmatprep.subr.mxu0 0.0
        %385 = vmatpush1.msra.mxu0 0.0
        %386 = vmatprep.subr.mxu0 0.0
        %387 = vmatpush1.msra.mxu0 0.0
        %388 = vmatprep.subr.mxu0 0.0
        %389 = vmatpush1.msra.mxu0 0.0
        %390 = vmatprep.subr.mxu0 0.0
        %391 = vmatpush1.msra.mxu0 0.0
        %392 = vmatprep.subr.mxu0 0.0
        %393 = vmatpush1.msra.mxu0 0.0
        %394 = vmatprep.subr.mxu0 0.0
        %395 = vmatpush1.msra.mxu0 0.0
        %396 = vmatprep.subr.mxu0 0.0
        %397 = vmatpush1.msra.mxu0 0.0
        %398 = vmatprep.subr.mxu0 0.0
        %399 = vmatpush1.msra.mxu0 0.0
        %400 = vmatprep.mubr.f32.mxu0 0.0
        %401 = vmatmul.mubr.f32.gmra.mrb[0].mxu0 %v331
        %v402 = vpop.f32.mrb[0].mxu0
        %v403 = vadd.f32 0.0, %v402
        %v404 = vpop.f32.mrb[0].mxu0
        %405 = vdwg.mxu0
        %v407 = vsel %vm329, %v326, 0
        %v410 = vsel %vm333, %v325, 0
        %412 = vmatprep.subr.mxu0 0.0
        %413 = vmatpush1.msra.mxu0 %v410
        %414 = vmatprep.subr.mxu0 0.0
        %415 = vmatpush1.msra.mxu0 0.0
        %416 = vmatprep.subr.mxu0 0.0
        %417 = vmatpush1.msra.mxu0 0.0
        %418 = vmatprep.subr.mxu0 0.0
        %419 = vmatpush1.msra.mxu0 0.0
        %420 = vmatprep.subr.mxu0 0.0
        %421 = vmatpush1.msra.mxu0 0.0
        %422 = vmatprep.subr.mxu0 0.0
        %423 = vmatpush1.msra.mxu0 0.0
        %424 = vmatprep.subr.mxu0 0.0
        %425 = vmatpush1.msra.mxu0 0.0
        %426 = vmatprep.subr.mxu0 0.0
        %427 = vmatpush1.msra.mxu0 0.0
        %428 = vmatprep.subr.mxu0 0.0
        %429 = vmatpush1.msra.mxu0 0.0
        %430 = vmatprep.subr.mxu0 0.0
        %431 = vmatpush1.msra.mxu0 0.0
        %432 = vmatprep.subr.mxu0 0.0
        %433 = vmatpush1.msra.mxu0 0.0
        %434 = vmatprep.subr.mxu0 0.0
        %435 = vmatpush1.msra.mxu0 0.0
        %436 = vmatprep.subr.mxu0 0.0
        %437 = vmatpush1.msra.mxu0 0.0
        %438 = vmatprep.subr.mxu0 0.0
        %439 = vmatpush1.msra.mxu0 0.0
        %440 = vmatprep.subr.mxu0 0.0
        %441 = vmatpush1.msra.mxu0 0.0
        %442 = vmatprep.subr.mxu0 0.0
        %443 = vmatpush1.msra.mxu0 0.0
        %444 = vmatprep.subr.mxu0 0.0
        %445 = vmatpush1.msra.mxu0 0.0
        %446 = vmatprep.subr.mxu0 0.0
        %447 = vmatpush1.msra.mxu0 0.0
        %448 = vmatprep.subr.mxu0 0.0
        %449 = vmatpush1.msra.mxu0 0.0
        %450 = vmatprep.subr.mxu0 0.0
        %451 = vmatpush1.msra.mxu0 0.0
        %452 = vmatprep.subr.mxu0 0.0
        %453 = vmatpush1.msra.mxu0 0.0
        %454 = vmatprep.subr.mxu0 0.0
        %455 = vmatpush1.msra.mxu0 0.0
        %456 = vmatprep.subr.mxu0 0.0
        %457 = vmatpush1.msra.mxu0 0.0
        %458 = vmatprep.subr.mxu0 0.0
        %459 = vmatpush1.msra.mxu0 0.0
        %460 = vmatprep.subr.mxu0 0.0
        %461 = vmatpush1.msra.mxu0 0.0
        %462 = vmatprep.subr.mxu0 0.0
        %463 = vmatpush1.msra.mxu0 0.0
        %464 = vmatprep.subr.mxu0 0.0
        %465 = vmatpush1.msra.mxu0 0.0
        %466 = vmatprep.subr.mxu0 0.0
        %467 = vmatpush1.msra.mxu0 0.0
        %468 = vmatprep.subr.mxu0 0.0
        %469 = vmatpush1.msra.mxu0 0.0
        %470 = vmatprep.subr.mxu0 0.0
        %471 = vmatpush1.msra.mxu0 0.0
        %472 = vmatprep.subr.mxu0 0.0
        %473 = vmatpush1.msra.mxu0 0.0
        %474 = vmatprep.subr.mxu0 0.0
        %475 = vmatpush1.msra.mxu0 0.0
        %476 = vmatprep.mubr.f32.mxu0 0.0
        %477 = vmatmul.mubr.f32.gmra.mrb[0].mxu0 %v407
        %v478 = vpop.f32.mrb[0].mxu0
        %v479 = vadd.f32 %v403, %v478
        %v480 = vpop.f32.mrb[0].mxu0
        %481 = vdwg.mxu0
        %v482 = vld [vmem:[%s2] sm:$0xff]
        %484 = vset.pattern.permute.xlu0 0
        %485 = vperm.xlu0 %484, %v482
        %v486 = vpop.permute.xlu0 %485
        %v488 = vadd.f32 %v479, %v486
        %v489 = vmax.f32 %v488, 0.0
        %491 = vrot.lane.b32.xlu0 %v489, 1
        %v492 = vpop.permute.xlu0 %491
        %v494 = vsel %vm324, 0.0, %v492
        %v495 = vld [vmem:[%s3] sm:$0xff]
        %s496 = scalar_lea.vmem %s3, 8
        %v497 = vld [vmem:[%s496] sm:$0xff]
        %vm498 = vcmask 64512
        %v500 = vsel %vm498, %v497, 0
        %502 = vmatprep.subr.mxu0 0.0
        %503 = vmatpush1.msra.mxu0 %v489
        %504 = vmatprep.subr.mxu0 0.0
        %505 = vmatpush1.msra.mxu0 0.0
        %506 = vmatprep.subr.mxu0 0.0
        %507 = vmatpush1.msra.mxu0 0.0
        %508 = vmatprep.subr.mxu0 0.0
        %509 = vmatpush1.msra.mxu0 0.0
        %510 = vmatprep.subr.mxu0 0.0
        %511 = vmatpush1.msra.mxu0 0.0
        %512 = vmatprep.subr.mxu0 0.0
        %513 = vmatpush1.msra.mxu0 0.0
        %514 = vmatprep.subr.mxu0 0.0
        %515 = vmatpush1.msra.mxu0 0.0
        %516 = vmatprep.subr.mxu0 0.0
        %517 = vmatpush1.msra.mxu0 0.0
        %518 = vmatprep.subr.mxu0 0.0
        %519 = vmatpush1.msra.mxu0 0.0
        %520 = vmatprep.subr.mxu0 0.0
        %521 = vmatpush1.msra.mxu0 0.0
        %522 = vmatprep.subr.mxu0 0.0
        %523 = vmatpush1.msra.mxu0 0.0
        %524 = vmatprep.subr.mxu0 0.0
        %525 = vmatpush1.msra.mxu0 0.0
        %526 = vmatprep.subr.mxu0 0.0
        %527 = vmatpush1.msra.mxu0 0.0
        %528 = vmatprep.subr.mxu0 0.0
        %529 = vmatpush1.msra.mxu0 0.0
        %530 = vmatprep.subr.mxu0 0.0
        %531 = vmatpush1.msra.mxu0 0.0
        %532 = vmatprep.subr.mxu0 0.0
        %533 = vmatpush1.msra.mxu0 0.0
        %534 = vmatprep.subr.mxu0 0.0
        %535 = vmatpush1.msra.mxu0 0.0
        %536 = vmatprep.subr.mxu0 0.0
        %537 = vmatpush1.msra.mxu0 0.0
        %538 = vmatprep.subr.mxu0 0.0
        %539 = vmatpush1.msra.mxu0 0.0
        %540 = vmatprep.subr.mxu0 0.0
        %541 = vmatpush1.msra.mxu0 0.0
        %542 = vmatprep.subr.mxu0 0.0
        %543 = vmatpush1.msra.mxu0 0.0
        %544 = vmatprep.subr.mxu0 0.0
        %545 = vmatpush1.msra.mxu0 0.0
        %546 = vmatprep.subr.mxu0 0.0
        %547 = vmatpush1.msra.mxu0 0.0
        %548 = vmatprep.subr.mxu0 0.0
        %549 = vmatpush1.msra.mxu0 0.0
        %550 = vmatprep.subr.mxu0 0.0
        %551 = vmatpush1.msra.mxu0 0.0
        %552 = vmatprep.subr.mxu0 0.0
        %553 = vmatpush1.msra.mxu0 0.0
        %554 = vmatprep.subr.mxu0 0.0
        %555 = vmatpush1.msra.mxu0 0.0
        %556 = vmatprep.subr.mxu0 0.0
        %557 = vmatpush1.msra.mxu0 0.0
        %558 = vmatprep.subr.mxu0 0.0
        %559 = vmatpush1.msra.mxu0 0.0
        %560 = vmatprep.subr.mxu0 0.0
        %561 = vmatpush1.msra.mxu0 0.0
        %562 = vmatprep.subr.mxu0 0.0
        %563 = vmatpush1.msra.mxu0 0.0
        %564 = vmatprep.subr.mxu0 0.0
        %565 = vmatpush1.msra.mxu0 0.0
        %566 = vmatprep.mubr.f32.mxu0 0.0
        %567 = vmatmul.mubr.f32.gmra.mrb[0].mxu0 %v500
        %v568 = vpop.f32.mrb[0].mxu0
        %v569 = vadd.f32 0.0, %v568
        %v570 = vpop.f32.mrb[0].mxu0
        %571 = vdwg.mxu0
        %v573 = vsel %vm498, %v495, 0
        %575 = vmatprep.subr.mxu0 0.0
        %576 = vmatpush1.msra.mxu0 %v494
        %577 = vmatprep.subr.mxu0 0.0
        %578 = vmatpush1.msra.mxu0 0.0
        %579 = vmatprep.subr.mxu0 0.0
        %580 = vmatpush1.msra.mxu0 0.0
        %581 = vmatprep.subr.mxu0 0.0
        %582 = vmatpush1.msra.mxu0 0.0
        %583 = vmatprep.subr.mxu0 0.0
        %584 = vmatpush1.msra.mxu0 0.0
        %585 = vmatprep.subr.mxu0 0.0
        %586 = vmatpush1.msra.mxu0 0.0
        %587 = vmatprep.subr.mxu0 0.0
        %588 = vmatpush1.msra.mxu0 0.0
        %589 = vmatprep.subr.mxu0 0.0
        %590 = vmatpush1.msra.mxu0 0.0
        %591 = vmatprep.subr.mxu0 0.0
        %592 = vmatpush1.msra.mxu0 0.0
        %593 = vmatprep.subr.mxu0 0.0
        %594 = vmatpush1.msra.mxu0 0.0
        %595 = vmatprep.subr.mxu0 0.0
        %596 = vmatpush1.msra.mxu0 0.0
        %597 = vmatprep.subr.mxu0 0.0
        %598 = vmatpush1.msra.mxu0 0.0
        %599 = vmatprep.subr.mxu0 0.0
        %600 = vmatpush1.msra.mxu0 0.0
        %601 = vmatprep.subr.mxu0 0.0
        %602 = vmatpush1.msra.mxu0 0.0
        %603 = vmatprep.subr.mxu0 0.0
        %604 = vmatpush1.msra.mxu0 0.0
        %605 = vmatprep.subr.mxu0 0.0
        %606 = vmatpush1.msra.mxu0 0.0
        %607 = vmatprep.subr.mxu0 0.0
        %608 = vmatpush1.msra.mxu0 0.0
        %609 = vmatprep.subr.mxu0 0.0
        %610 = vmatpush1.msra.mxu0 0.0
        %611 = vmatprep.subr.mxu0 0.0
        %612 = vmatpush1.msra.mxu0 0.0
        %613 = vmatprep.subr.mxu0 0.0
        %614 = vmatpush1.msra.mxu0 0.0
        %615 = vmatprep.subr.mxu0 0.0
        %616 = vmatpush1.msra.mxu0 0.0
        %617 = vmatprep.subr.mxu0 0.0
        %618 = vmatpush1.msra.mxu0 0.0
        %619 = vmatprep.subr.mxu0 0.0
        %620 = vmatpush1.msra.mxu0 0.0
        %621 = vmatprep.subr.mxu0 0.0
        %622 = vmatpush1.msra.mxu0 0.0
        %623 = vmatprep.subr.mxu0 0.0
        %624 = vmatpush1.msra.mxu0 0.0
        %625 = vmatprep.subr.mxu0 0.0
        %626 = vmatpush1.msra.mxu0 0.0
        %627 = vmatprep.subr.mxu0 0.0
        %628 = vmatpush1.msra.mxu0 0.0
        %629 = vmatprep.subr.mxu0 0.0
        %630 = vmatpush1.msra.mxu0 0.0
        %631 = vmatprep.subr.mxu0 0.0
        %632 = vmatpush1.msra.mxu0 0.0
        %633 = vmatprep.subr.mxu0 0.0
        %634 = vmatpush1.msra.mxu0 0.0
        %635 = vmatprep.subr.mxu0 0.0
        %636 = vmatpush1.msra.mxu0 0.0
        %637 = vmatprep.subr.mxu0 0.0
        %638 = vmatpush1.msra.mxu0 0.0
        %639 = vmatprep.mubr.f32.mxu0 0.0
        %640 = vmatmul.mubr.f32.gmra.mrb[0].mxu0 %v573
        %v641 = vpop.f32.mrb[0].mxu0
        %v642 = vadd.f32 %v569, %v641
        %v643 = vpop.f32.mrb[0].mxu0
        %644 = vdwg.mxu0
        %v645 = vld [vmem:[#allocation4] sm:$0xff]
        %647 = vset.pattern.permute.xlu0 0
        %648 = vperm.xlu0 %647, %v645
        %v649 = vpop.permute.xlu0 %648
        %v651 = vadd.f32 %v642, %v649
        %v652 = vmax.f32 %v651, 0.0
        %v653 = vld [vmem:[%s5] sm:$0xff]
        %v654 = vld [vmem:[#allocation6] sm:$0xff]
        %656 = vset.pattern.permute.xlu0 0
        %657 = vperm.xlu0 %656, %v654
        %v658 = vpop.permute.xlu0 %657
        %v661 = vsel %vm329, %v653, 0
        %663 = vmatprep.subr.mxu0 0.0
        %664 = vmatpush1.msra.mxu0 %v334
        %665 = vmatprep.subr.mxu0 0.0
        %666 = vmatpush1.msra.mxu0 0.0
        %667 = vmatprep.subr.mxu0 0.0
        %668 = vmatpush1.msra.mxu0 0.0
        %669 = vmatprep.subr.mxu0 0.0
        %670 = vmatpush1.msra.mxu0 0.0
        %671 = vmatprep.subr.mxu0 0.0
        %672 = vmatpush1.msra.mxu0 0.0
        %673 = vmatprep.subr.mxu0 0.0
        %674 = vmatpush1.msra.mxu0 0.0
        %675 = vmatprep.subr.mxu0 0.0
        %676 = vmatpush1.msra.mxu0 0.0
        %677 = vmatprep.subr.mxu0 0.0
        %678 = vmatpush1.msra.mxu0 0.0
        %679 = vmatprep.subr.mxu0 0.0
        %680 = vmatpush1.msra.mxu0 0.0
        %681 = vmatprep.subr.mxu0 0.0
        %682 = vmatpush1.msra.mxu0 0.0
        %683 = vmatprep.subr.mxu0 0.0
        %684 = vmatpush1.msra.mxu0 0.0
        %685 = vmatprep.subr.mxu0 0.0
        %686 = vmatpush1.msra.mxu0 0.0
        %687 = vmatprep.subr.mxu0 0.0
        %688 = vmatpush1.msra.mxu0 0.0
        %689 = vmatprep.subr.mxu0 0.0
        %690 = vmatpush1.msra.mxu0 0.0
        %691 = vmatprep.subr.mxu0 0.0
        %692 = vmatpush1.msra.mxu0 0.0
        %693 = vmatprep.subr.mxu0 0.0
        %694 = vmatpush1.msra.mxu0 0.0
        %695 = vmatprep.subr.mxu0 0.0
        %696 = vmatpush1.msra.mxu0 0.0
        %697 = vmatprep.subr.mxu0 0.0
        %698 = vmatpush1.msra.mxu0 0.0
        %699 = vmatprep.subr.mxu0 0.0
        %700 = vmatpush1.msra.mxu0 0.0
        %701 = vmatprep.subr.mxu0 0.0
        %702 = vmatpush1.msra.mxu0 0.0
        %703 = vmatprep.subr.mxu0 0.0
        %704 = vmatpush1.msra.mxu0 0.0
        %705 = vmatprep.subr.mxu0 0.0
        %706 = vmatpush1.msra.mxu0 0.0
        %707 = vmatprep.subr.mxu0 0.0
        %708 = vmatpush1.msra.mxu0 0.0
        %709 = vmatprep.subr.mxu0 0.0
        %710 = vmatpush1.msra.mxu0 0.0
        %711 = vmatprep.subr.mxu0 0.0
        %712 = vmatpush1.msra.mxu0 0.0
        %713 = vmatprep.subr.mxu0 0.0
        %714 = vmatpush1.msra.mxu0 0.0
        %715 = vmatprep.subr.mxu0 0.0
        %716 = vmatpush1.msra.mxu0 0.0
        %717 = vmatprep.subr.mxu0 0.0
        %718 = vmatpush1.msra.mxu0 0.0
        %719 = vmatprep.subr.mxu0 0.0
        %720 = vmatpush1.msra.mxu0 0.0
        %721 = vmatprep.subr.mxu0 0.0
        %722 = vmatpush1.msra.mxu0 0.0
        %723 = vmatprep.subr.mxu0 0.0
        %724 = vmatpush1.msra.mxu0 0.0
        %725 = vmatprep.subr.mxu0 0.0
        %726 = vmatpush1.msra.mxu0 0.0
        %727 = vmatprep.mubr.f32.mxu0 0.0
        %728 = vmatmul.mubr.f32.gmra.mrb[0].mxu0 %v661
        %v729 = vpop.f32.mrb[0].mxu0
        %v730 = vadd.f32 %v658, %v729
        %v731 = vpop.f32.mrb[0].mxu0
        %732 = vdwg.mxu0
        %v733 = vadd.f32 %v652, %v730
        %v734 = vmax.f32 %v733, 0.0
        %vm735 = vcmask 130048
        %736 = vst.msk [vmem:[%s318] sm:$0xff] %vm735, %v734
        %p737 = scmp.lt.s32.totalorder %s22, 1
        %s738 = scalar_select %p737, %s22, 1
        %s739 = smul.addr %s738, 8
        %s740 = scalar_lea.vmem %s7, %s739
        // Predicated region
        $region61: #{_lambda_.3} parent=47 // pred_check
          %p741 = pneg %p192
        $region62: #{_lambda_.3} parent=47 // pred_check_branch
          %743 = sbr.rel (%p741) target = $region64
        $region63: #{_lambda_.3} parent=47 // pred_region
          _
        $region64: #{_lambda_.3} parent=47 // pred_fallthru
          _
      $region48: #{_lambda_.3} parent=5 // pred_fallthru
        _
      %p744 = scmp.le.s32.totalorder 2, %s17
      // Predicated region
      $region65: #{_lambda_.3} parent=5 // pred_check
        %p745 = pneg %p744
      $region66: #{_lambda_.3} parent=5 // pred_check_branch
        %747 = sbr.rel (%p745) target = $region68
      $region67: #{_lambda_.3} parent=5 // pred_region
        %s748 = ssub.s32 %s17, 2
        // Predicated region
        $region69: #{_lambda_.3} parent=67 // pred_check
          %p749 = pneg %p198
        $region70: #{_lambda_.3} parent=67 // pred_check_branch
          %751 = sbr.rel (%p749) target = $region72
        $region71: #{_lambda_.3} parent=67 // pred_region
          %p752 = scmp.lt.s32.totalorder %s23, 1
          %s753 = scalar_select %p752, %s23, 1
          %s754 = smul.addr %s753, 8
          %s755 = scalar_lea.vmem %s7, %s754
        $region72: #{_lambda_.3} parent=67 // pred_fallthru
          _
      $region68: #{_lambda_.3} parent=5 // pred_fallthru
        _
    $region6: #{_lambda_.3} parent=1 // loop_footer
      %s21 = sadd.s32 1, %s17
    $region7: #{_lambda_.3} parent=1 // loop_footer_branch
      %16 = sbr.rel target = $region3
    $region8: #{_lambda_.3} parent=1 // loop_exit
      _
    %756 = vsyncpa [#allocation3], 1
    %s757 = scalar_lea.sflag [#allocation3], 1
    %758 = vsyncpa %s757, 1
    %759 = vsyncpa [#allocation5], 1

// kernel: _lambda_.5
$region0: #{_lambda_.5}
  #allocation0 [shape = 'u32[]', space=smem, size = 0x4, offset = 0x4, fixed_abs, tag = 'smem constant byte address 0x4 - core index']
  #allocation1 [shape = 'u32[144,128]{1,0:T(1,128)}', space=vmem, size = 0x12000, scoped, tag = 'internal scratch']
  %s0 = inlined_call_operand.vmem [shape: f32[2,8,16], index: 0, kind: input, shape index: {}]
  %s1 = inlined_call_operand.vmem [shape: f32[2,16,8], index: 1, kind: input, shape index: {}]
  %s2 = inlined_call_operand.vmem [shape: f32[16,1], index: 2, kind: input, shape index: {}]
  %s3 = inlined_call_operand.vmem [shape: f32[2,16,16], index: 3, kind: input, shape index: {}]
  %s4 = inlined_call_operand.vmem [shape: f32[16,1], index: 4, kind: input, shape index: {}]
  %s5 = inlined_call_operand.vmem [shape: f32[16,8], index: 5, kind: input, shape index: {}]
  %s6 = inlined_call_operand.vmem [shape: f32[16,1], index: 6, kind: input, shape index: {}]
  %s7 = inlined_call_operand.hbm [shape: f32[2,16,16], index: 7, kind: output, shape index: {}]
  %s8 = sld [smem:[#allocation0]]
  $region61: #{_lambda_.5} parent=0
    _
  %s10 = ssub.s32 1, %s8
  %s11 = scalar_select 0, %s10, %s8
  $region1: #{_lambda_.5} parent=0
    #allocation2 [shape = 'u8[16384]{0}', space=vmem, size = 0x4000, scoped, tag = 'output window, operand 0']
    #allocation3 [shape = 's32[2]{0}', space=sflag, size = 0x8, scoped, tag = 'scoped memory for _lambda_.5']
    %12 = vsyncpa [#allocation3], 0
    %s13 = scalar_lea.sflag [#allocation3], 1
    %14 = vsyncpa %s13, 0
    loop: start=0, step=1, limit=4
    $region2: #{_lambda_.5} parent=1 // loop_pre_header
      _
    $region3: #{_lambda_.5} parent=1 // loop_header
      %s16 = sphi 0, %s20
      %p17 = scmp.ge.s32.totalorder %s16, 4
      %s26 = sphi 0, %s28
      %s29 = sphi 0, %s26
      %s30 = sphi 0, %s29
      %s46 = sphi 0, %s30
      %s50 = sphi 0, %s50
      %s52 = sphi 0, %s50
      %s53 = sphi 0, %s52
      %s67 = sphi 0, %s53
      %s71 = sphi 0, %s71
      %s73 = sphi 0, %s71
      %s74 = sphi 0, %s73
      %s88 = sphi 0, %s74
      %s92 = sphi 0, %s92
      %s94 = sphi 0, %s92
      %s95 = sphi 0, %s94
      %s109 = sphi 0, %s95
      %s113 = sphi 0, %s113
      %s115 = sphi 0, %s113
      %s116 = sphi 0, %s115
      %s130 = sphi 0, %s116
      %s134 = sphi 0, %s134
      %s136 = sphi 0, %s134
      %s137 = sphi 0, %s136
      %s151 = sphi 0, %s137
      %s155 = sphi 0, %s155
      %s157 = sphi 0, %s155
      %s158 = sphi 0, %s157
      %s172 = sphi 0, %s158
      %s178 = sphi 0, %s180
      %s181 = sphi 0, %s178
      %s182 = sphi 0, %s181
      %s198 = sphi 0, %s182
    $region4: #{_lambda_.5} parent=1 // loop_header_branch
      %19 = sbr.rel (%p17) target = $region8
    $region5: #{_lambda_.5} parent=1 // loop_body
      %s21 = ssub.s32 %s16, 1
      %s22 = ssub.s32 %s16, 2
      %s23 = sadd.s32 %s16, 1
      %s24 = ssub.s32 %s16, %s23
      %p25 = scmp.eq.s32.totalorder %s24, 0
      %s27 = sadd.s32 %s26, 1
      %s28 = scalar_select %p25, %s26, %s27
      %p31 = pneg %p25
      %p32 = scmp.eq.s32.totalorder %s16, 1
      %p33 = por %p31, %p32
      %p34 = scmp.ne.s32.totalorder %s26, %s29
      %p35 = scmp.eq.s32.totalorder %s16, 0
      %p36 = por %p34, %p35
      %p37 = scmp.ne.s32.totalorder %s26, %s29
      %p38 = scmp.eq.s32.totalorder %s21, 1
      %p39 = por %p37, %p38
      %p40 = scmp.ne.s32.totalorder %s29, %s30
      %p41 = scmp.eq.s32.totalorder %s21, 0
      %p42 = por %p40, %p41
      %p43 = scmp.ne.s32.totalorder %s29, %s30
      %p44 = scmp.eq.s32.totalorder %s22, 1
      %p45 = por %p43, %p44
      %p47 = scmp.ne.s32.totalorder %s30, %s46
      %p48 = scmp.eq.s32.totalorder %s22, 0
      %p49 = por %p47, %p48
      %s51 = sadd.s32 %s50, 1
      %p54 = scmp.eq.s32.totalorder %s16, 1
      %p55 = scmp.ne.s32.totalorder %s50, %s52
      %p56 = scmp.eq.s32.totalorder %s16, 0
      %p57 = por %p55, %p56
      %p58 = scmp.ne.s32.totalorder %s50, %s52
      %p59 = scmp.eq.s32.totalorder %s21, 1
      %p60 = por %p58, %p59
      %p61 = scmp.ne.s32.totalorder %s52, %s53
      %p62 = scmp.eq.s32.totalorder %s21, 0
      %p63 = por %p61, %p62
      %p64 = scmp.ne.s32.totalorder %s52, %s53
      %p65 = scmp.eq.s32.totalorder %s22, 1
      %p66 = por %p64, %p65
      %p68 = scmp.ne.s32.totalorder %s53, %s67
      %p69 = scmp.eq.s32.totalorder %s22, 0
      %p70 = por %p68, %p69
      %s72 = sadd.s32 %s71, 1
      %p75 = scmp.eq.s32.totalorder %s16, 1
      %p76 = scmp.ne.s32.totalorder %s71, %s73
      %p77 = scmp.eq.s32.totalorder %s16, 0
      %p78 = por %p76, %p77
      %p79 = scmp.ne.s32.totalorder %s71, %s73
      %p80 = scmp.eq.s32.totalorder %s21, 1
      %p81 = por %p79, %p80
      %p82 = scmp.ne.s32.totalorder %s73, %s74
      %p83 = scmp.eq.s32.totalorder %s21, 0
      %p84 = por %p82, %p83
      %p85 = scmp.ne.s32.totalorder %s73, %s74
      %p86 = scmp.eq.s32.totalorder %s22, 1
      %p87 = por %p85, %p86
      %p89 = scmp.ne.s32.totalorder %s74, %s88
      %p90 = scmp.eq.s32.totalorder %s22, 0
      %p91 = por %p89, %p90
      %s93 = sadd.s32 %s92, 1
      %p96 = scmp.eq.s32.totalorder %s16, 1
      %p97 = scmp.ne.s32.totalorder %s92, %s94
      %p98 = scmp.eq.s32.totalorder %s16, 0
      %p99 = por %p97, %p98
      %p100 = scmp.ne.s32.totalorder %s92, %s94
      %p101 = scmp.eq.s32.totalorder %s21, 1
      %p102 = por %p100, %p101
      %p103 = scmp.ne.s32.totalorder %s94, %s95
      %p104 = scmp.eq.s32.totalorder %s21, 0
      %p105 = por %p103, %p104
      %p106 = scmp.ne.s32.totalorder %s94, %s95
      %p107 = scmp.eq.s32.totalorder %s22, 1
      %p108 = por %p106, %p107
      %p110 = scmp.ne.s32.totalorder %s95, %s109
      %p111 = scmp.eq.s32.totalorder %s22, 0
      %p112 = por %p110, %p111
      %s114 = sadd.s32 %s113, 1
      %p117 = scmp.eq.s32.totalorder %s16, 1
      %p118 = scmp.ne.s32.totalorder %s113, %s115
      %p119 = scmp.eq.s32.totalorder %s16, 0
      %p120 = por %p118, %p119
      %p121 = scmp.ne.s32.totalorder %s113, %s115
      %p122 = scmp.eq.s32.totalorder %s21, 1
      %p123 = por %p121, %p122
      %p124 = scmp.ne.s32.totalorder %s115, %s116
      %p125 = scmp.eq.s32.totalorder %s21, 0
      %p126 = por %p124, %p125
      %p127 = scmp.ne.s32.totalorder %s115, %s116
      %p128 = scmp.eq.s32.totalorder %s22, 1
      %p129 = por %p127, %p128
      %p131 = scmp.ne.s32.totalorder %s116, %s130
      %p132 = scmp.eq.s32.totalorder %s22, 0
      %p133 = por %p131, %p132
      %s135 = sadd.s32 %s134, 1
      %p138 = scmp.eq.s32.totalorder %s16, 1
      %p139 = scmp.ne.s32.totalorder %s134, %s136
      %p140 = scmp.eq.s32.totalorder %s16, 0
      %p141 = por %p139, %p140
      %p142 = scmp.ne.s32.totalorder %s134, %s136
      %p143 = scmp.eq.s32.totalorder %s21, 1
      %p144 = por %p142, %p143
      %p145 = scmp.ne.s32.totalorder %s136, %s137
      %p146 = scmp.eq.s32.totalorder %s21, 0
      %p147 = por %p145, %p146
      %p148 = scmp.ne.s32.totalorder %s136, %s137
      %p149 = scmp.eq.s32.totalorder %s22, 1
      %p150 = por %p148, %p149
      %p152 = scmp.ne.s32.totalorder %s137, %s151
      %p153 = scmp.eq.s32.totalorder %s22, 0
      %p154 = por %p152, %p153
      %s156 = sadd.s32 %s155, 1
      %p159 = scmp.eq.s32.totalorder %s16, 1
      %p160 = scmp.ne.s32.totalorder %s155, %s157
      %p161 = scmp.eq.s32.totalorder %s16, 0
      %p162 = por %p160, %p161
      %p163 = scmp.ne.s32.totalorder %s155, %s157
      %p164 = scmp.eq.s32.totalorder %s21, 1
      %p165 = por %p163, %p164
      %p166 = scmp.ne.s32.totalorder %s157, %s158
      %p167 = scmp.eq.s32.totalorder %s21, 0
      %p168 = por %p166, %p167
      %p169 = scmp.ne.s32.totalorder %s157, %s158
      %p170 = scmp.eq.s32.totalorder %s22, 1
      %p171 = por %p169, %p170
      %p173 = scmp.ne.s32.totalorder %s158, %s172
      %p174 = scmp.eq.s32.totalorder %s22, 0
      %p175 = por %p173, %p174
      %s176 = ssub.s32 %s16, %s23
      %p177 = scmp.eq.s32.totalorder %s176, 0
      %s179 = sadd.s32 %s178, 1
      %s180 = scalar_select %p177, %s178, %s179
      %p183 = pneg %p177
      %p184 = scmp.eq.s32.totalorder %s16, 1
      %p185 = por %p183, %p184
      %p186 = scmp.ne.s32.totalorder %s178, %s181
      %p187 = scmp.eq.s32.totalorder %s16, 0
      %p188 = por %p186, %p187
      %p189 = scmp.ne.s32.totalorder %s178, %s181
      %p190 = scmp.eq.s32.totalorder %s21, 1
      %p191 = por %p189, %p190
      %p192 = scmp.ne.s32.totalorder %s181, %s182
      %p193 = scmp.eq.s32.totalorder %s21, 0
      %p194 = por %p192, %p193
      %p195 = scmp.ne.s32.totalorder %s181, %s182
      %p196 = scmp.eq.s32.totalorder %s22, 1
      %p197 = por %p195, %p196
      %p199 = scmp.ne.s32.totalorder %s182, %s198
      %p200 = scmp.eq.s32.totalorder %s22, 0
      %p201 = por %p199, %p200
      %p202 = scmp.le.s32.totalorder 1, %s16
      %p203 = scmp.lt.s32.totalorder %s16, 3
      %p204 = pnand %p202, %p203
      %p205 = pneg %p204
      // Predicated region
      $region9: #{_lambda_.5} parent=5 // pred_check
        _
      $region10: #{_lambda_.5} parent=5 // pred_check_branch
        %207 = sbr.rel (%p204) target = $region12
      $region11: #{_lambda_.5} parent=5 // pred_region
        %s208 = ssub.s32 %s16, 1
        // Predicated region
        $region13: #{_lambda_.5} parent=11 // pred_check
          %p209 = pneg %p63
        $region14: #{_lambda_.5} parent=11 // pred_check_branch
          %211 = sbr.rel (%p209) target = $region16
        $region15: #{_lambda_.5} parent=11 // pred_region
          _
        $region16: #{_lambda_.5} parent=11 // pred_fallthru
          _
        // Predicated region
        $region17: #{_lambda_.5} parent=11 // pred_check
          %p212 = pneg %p84
        $region18: #{_lambda_.5} parent=11 // pred_check_branch
          %214 = sbr.rel (%p212) target = $region20
        $region19: #{_lambda_.5} parent=11 // pred_region
          _
        $region20: #{_lambda_.5} parent=11 // pred_fallthru
          _
        // Predicated region
        $region21: #{_lambda_.5} parent=11 // pred_check
          %p215 = pneg %p105
        $region22: #{_lambda_.5} parent=11 // pred_check_branch
          %217 = sbr.rel (%p215) target = $region24
        $region23: #{_lambda_.5} parent=11 // pred_region
          _
        $region24: #{_lambda_.5} parent=11 // pred_fallthru
          _
        // Predicated region
        $region25: #{_lambda_.5} parent=11 // pred_check
          %p218 = pneg %p126
        $region26: #{_lambda_.5} parent=11 // pred_check_branch
          %220 = sbr.rel (%p218) target = $region28
        $region27: #{_lambda_.5} parent=11 // pred_region
          _
        $region28: #{_lambda_.5} parent=11 // pred_fallthru
          _
        // Predicated region
        $region29: #{_lambda_.5} parent=11 // pred_check
          %p221 = pneg %p147
        $region30: #{_lambda_.5} parent=11 // pred_check_branch
          %223 = sbr.rel (%p221) target = $region32
        $region31: #{_lambda_.5} parent=11 // pred_region
          _
        $region32: #{_lambda_.5} parent=11 // pred_fallthru
          _
        // Predicated region
        $region33: #{_lambda_.5} parent=11 // pred_check
          %p224 = pneg %p168
        $region34: #{_lambda_.5} parent=11 // pred_check_branch
          %226 = sbr.rel (%p224) target = $region36
        $region35: #{_lambda_.5} parent=11 // pred_region
          _
        $region36: #{_lambda_.5} parent=11 // pred_fallthru
          _
      $region12: #{_lambda_.5} parent=5 // pred_fallthru
        _
      %p227 = scmp.lt.s32.totalorder %s16, 2
      // Predicated region
      $region37: #{_lambda_.5} parent=5 // pred_check
        %p228 = pneg %p227
      $region38: #{_lambda_.5} parent=5 // pred_check_branch
        %230 = sbr.rel (%p228) target = $region40
      $region39: #{_lambda_.5} parent=5 // pred_region
        // Predicated region
        $region41: #{_lambda_.5} parent=39 // pred_check
          %p231 = pneg %p36
        $region42: #{_lambda_.5} parent=39 // pred_check_branch
          %233 = sbr.rel (%p231) target = $region44
        $region43: #{_lambda_.5} parent=39 // pred_region
          %p234 = scmp.lt.s32.totalorder %s16, 1
          %s235 = scalar_select %p234, %s16, 1
          %s236 = smul.addr %s235, 8
          %s237 = scalar_lea.vmem %s0, %s236
        $region44: #{_lambda_.5} parent=39 // pred_fallthru
          _
      $region40: #{_lambda_.5} parent=5 // pred_fallthru
        _
      %p238 = scmp.le.s32.totalorder 1, %s16
      %p239 = scmp.lt.s32.totalorder %s16, 3
      %p240 = pnand %p238, %p239
      %p241 = pneg %p240
      // Predicated region
      $region45: #{_lambda_.5} parent=5 // pred_check
        _
      $region46: #{_lambda_.5} parent=5 // pred_check_branch
        %243 = sbr.rel (%p240) target = $region48
      $region47: #{_lambda_.5} parent=5 // pred_region
        %s244 = ssub.s32 %s16, 1
        %p245 = scmp.lt.s32.totalorder %s21, 1
        %s246 = scalar_select %p245, %s21, 1
        %s247 = smul.addr %s246, 8
        %s248 = scalar_lea.vmem %s0, %s247
        %p249 = pneg %p42
        %p250 = pneg %p39
        %p251 = pneg %p63
        %p252 = pneg %p60
        %p253 = pneg %p84
        %p254 = pneg %p81
        %p255 = pneg %p105
        %p256 = pneg %p102
        %p257 = pneg %p126
        %p258 = pneg %p123
        %p259 = pneg %p147
        %p260 = pneg %p144
        %p261 = pneg %p168
        %p262 = pneg %p165
        %p263 = pneg %p194
        %p264 = pneg %p191
        %s265 = sand.u32 %s181, 1
        %s266 = scalar_lea.sflag [#allocation3], %s265
        %s267 = sand.u32 %s181, 1
        %s268 = smul.addr %s267, 16
        %s269 = scalar_lea.vmem [#allocation2], %s268
        %p270 = scmp.lt.s32.totalorder %s21, 1
        %s271 = scalar_select %p270, %s21, 1
        %s272 = smul.addr %s271, 8
        %s273 = scalar_lea.vmem %s0, %s272
        %v274 = vld [vmem:[%s273] sm:$0xff]
        %276 = vrot.lane.b32.xlu0 %v274, 4
        %v277 = vpop.permute.xlu0 %276
        %vm279 = vcmask 31744
        %v280 = vsel %vm279, 0.0, %v277
        %v281 = vld [vmem:[%s1] sm:$0xff]
        %v282 = vld [vmem:[%s1 + $0x8] sm:$0xff]
        %s283 = scalar_lea.vmem %s1, 16
        %v284 = vld [vmem:[%s283] sm:$0xff]
        %v285 = vld [vmem:[%s283 + $0x8] sm:$0xff]
        %vm286 = vcmask 64512
        %v288 = vsel %vm286, %v284, 0
        %v291 = vsel %vm286, %v285, 0
        %293 = vmatprep.subr.mxu0 0.0
        %294 = vmatpush1.msra.mxu0 %v274
        %295 = vmatprep.subr.mxu0 0.0
        %296 = vmatpush1.msra.mxu0 0.0
        %297 = vmatprep.subr.mxu0 0.0
        %298 = vmatpush1.msra.mxu0 0.0
        %299 = vmatprep.subr.mxu0 0.0
        %300 = vmatpush1.msra.mxu0 0.0
        %301 = vmatprep.subr.mxu0 0.0
        %302 = vmatpush1.msra.mxu0 0.0
        %303 = vmatprep.subr.mxu0 0.0
        %304 = vmatpush1.msra.mxu0 0.0
        %305 = vmatprep.subr.mxu0 0.0
        %306 = vmatpush1.msra.mxu0 0.0
        %307 = vmatprep.subr.mxu0 0.0
        %308 = vmatpush1.msra.mxu0 0.0
        %309 = vmatprep.subr.mxu0 0.0
        %310 = vmatpush1.msra.mxu0 0.0
        %311 = vmatprep.subr.mxu0 0.0
        %312 = vmatpush1.msra.mxu0 0.0
        %313 = vmatprep.subr.mxu0 0.0
        %314 = vmatpush1.msra.mxu0 0.0
        %315 = vmatprep.subr.mxu0 0.0
        %316 = vmatpush1.msra.mxu0 0.0
        %317 = vmatprep.subr.mxu0 0.0
        %318 = vmatpush1.msra.mxu0 0.0
        %319 = vmatprep.subr.mxu0 0.0
        %320 = vmatpush1.msra.mxu0 0.0
        %321 = vmatprep.subr.mxu0 0.0
        %322 = vmatpush1.msra.mxu0 0.0
        %323 = vmatprep.subr.mxu0 0.0
        %324 = vmatpush1.msra.mxu0 0.0
        %325 = vmatprep.subr.mxu0 0.0
        %326 = vmatpush1.msra.mxu0 0.0
        %327 = vmatprep.subr.mxu0 0.0
        %328 = vmatpush1.msra.mxu0 0.0
        %329 = vmatprep.subr.mxu0 0.0
        %330 = vmatpush1.msra.mxu0 0.0
        %331 = vmatprep.subr.mxu0 0.0
        %332 = vmatpush1.msra.mxu0 0.0
        %333 = vmatprep.subr.mxu0 0.0
        %334 = vmatpush1.msra.mxu0 0.0
        %335 = vmatprep.subr.mxu0 0.0
        %336 = vmatpush1.msra.mxu0 0.0
        %337 = vmatprep.subr.mxu0 0.0
        %338 = vmatpush1.msra.mxu0 0.0
        %339 = vmatprep.subr.mxu0 0.0
        %340 = vmatpush1.msra.mxu0 0.0
        %341 = vmatprep.subr.mxu0 0.0
        %342 = vmatpush1.msra.mxu0 0.0
        %343 = vmatprep.subr.mxu0 0.0
        %344 = vmatpush1.msra.mxu0 0.0
        %345 = vmatprep.subr.mxu0 0.0
        %346 = vmatpush1.msra.mxu0 0.0
        %347 = vmatprep.subr.mxu0 0.0
        %348 = vmatpush1.msra.mxu0 0.0
        %349 = vmatprep.subr.mxu0 0.0
        %350 = vmatpush1.msra.mxu0 0.0
        %351 = vmatprep.subr.mxu0 0.0
        %352 = vmatpush1.msra.mxu0 0.0
        %353 = vmatprep.subr.mxu0 0.0
        %354 = vmatpush1.msra.mxu0 0.0
        %355 = vmatprep.subr.mxu0 0.0
        %356 = vmatpush1.msra.mxu0 0.0
        %357 = vmatprep.mubr.f32.mxu0 0.0
        %358 = vmatmul.mubr.f32.gmra.mrb[0].mxu0 %v288
        %v359 = vpop.f32.mrb[0].mxu0
        %v360 = vadd.f32 0.0, %v359
        %v361 = vpop.f32.mrb[0].mxu0
        %362 = vmatprep.mubr.f32.mxu0 0.0
        %363 = vmatmul.mubr.f32.gmra.mrb[0].mxu0 %v291
        %v364 = vpop.f32.mrb[0].mxu0
        %v365 = vadd.f32 0.0, %v364
        %v366 = vpop.f32.mrb[0].mxu0
        %367 = vdwg.mxu0
        %v369 = vsel %vm286, %v281, 0
        %v372 = vsel %vm286, %v282, 0
        %374 = vmatprep.subr.mxu0 0.0
        %375 = vmatpush1.msra.mxu0 %v280
        %376 = vmatprep.subr.mxu0 0.0
        %377 = vmatpush1.msra.mxu0 0.0
        %378 = vmatprep.subr.mxu0 0.0
        %379 = vmatpush1.msra.mxu0 0.0
        %380 = vmatprep.subr.mxu0 0.0
        %381 = vmatpush1.msra.mxu0 0.0
        %382 = vmatprep.subr.mxu0 0.0
        %383 = vmatpush1.msra.mxu0 0.0
        %384 = vmatprep.subr.mxu0 0.0
        %385 = vmatpush1.msra.mxu0 0.0
        %386 = vmatprep.subr.mxu0 0.0
        %387 = vmatpush1.msra.mxu0 0.0
        %388 = vmatprep.subr.mxu0 0.0
        %389 = vmatpush1.msra.mxu0 0.0
        %390 = vmatprep.subr.mxu0 0.0
        %391 = vmatpush1.msra.mxu0 0.0
        %392 = vmatprep.subr.mxu0 0.0
        %393 = vmatpush1.msra.mxu0 0.0
        %394 = vmatprep.subr.mxu0 0.0
        %395 = vmatpush1.msra.mxu0 0.0
        %396 = vmatprep.subr.mxu0 0.0
        %397 = vmatpush1.msra.mxu0 0.0
        %398 = vmatprep.subr.mxu0 0.0
        %399 = vmatpush1.msra.mxu0 0.0
        %400 = vmatprep.subr.mxu0 0.0
        %401 = vmatpush1.msra.mxu0 0.0
        %402 = vmatprep.subr.mxu0 0.0
        %403 = vmatpush1.msra.mxu0 0.0
        %404 = vmatprep.subr.mxu0 0.0
        %405 = vmatpush1.msra.mxu0 0.0
        %406 = vmatprep.subr.mxu0 0.0
        %407 = vmatpush1.msra.mxu0 0.0
        %408 = vmatprep.subr.mxu0 0.0
        %409 = vmatpush1.msra.mxu0 0.0
        %410 = vmatprep.subr.mxu0 0.0
        %411 = vmatpush1.msra.mxu0 0.0
        %412 = vmatprep.subr.mxu0 0.0
        %413 = vmatpush1.msra.mxu0 0.0
        %414 = vmatprep.subr.mxu0 0.0
        %415 = vmatpush1.msra.mxu0 0.0
        %416 = vmatprep.subr.mxu0 0.0
        %417 = vmatpush1.msra.mxu0 0.0
        %418 = vmatprep.subr.mxu0 0.0
        %419 = vmatpush1.msra.mxu0 0.0
        %420 = vmatprep.subr.mxu0 0.0
        %421 = vmatpush1.msra.mxu0 0.0
        %422 = vmatprep.subr.mxu0 0.0
        %423 = vmatpush1.msra.mxu0 0.0
        %424 = vmatprep.subr.mxu0 0.0
        %425 = vmatpush1.msra.mxu0 0.0
        %426 = vmatprep.subr.mxu0 0.0
        %427 = vmatpush1.msra.mxu0 0.0
        %428 = vmatprep.subr.mxu0 0.0
        %429 = vmatpush1.msra.mxu0 0.0
        %430 = vmatprep.subr.mxu0 0.0
        %431 = vmatpush1.msra.mxu0 0.0
        %432 = vmatprep.subr.mxu0 0.0
        %433 = vmatpush1.msra.mxu0 0.0
        %434 = vmatprep.subr.mxu0 0.0
        %435 = vmatpush1.msra.mxu0 0.0
        %436 = vmatprep.subr.mxu0 0.0
        %437 = vmatpush1.msra.mxu0 0.0
        %438 = vmatprep.mubr.f32.mxu0 0.0
        %439 = vmatmul.mubr.f32.gmra.mrb[0].mxu0 %v369
        %v440 = vpop.f32.mrb[0].mxu0
        %v441 = vadd.f32 %v360, %v440
        %v442 = vpop.f32.mrb[0].mxu0
        %443 = vmatprep.mubr.f32.mxu0 0.0
        %444 = vmatmul.mubr.f32.gmra.mrb[0].mxu0 %v372
        %v445 = vpop.f32.mrb[0].mxu0
        %v446 = vadd.f32 %v365, %v445
        %v447 = vpop.f32.mrb[0].mxu0
        %448 = vdwg.mxu0
        %v449 = vld [vmem:[%s2] sm:$0xff]
        %v450 = vld [vmem:[%s2 + $0x8] sm:$0xff]
        %452 = vset.pattern.permute.xlu0 0
        %453 = vperm.xlu0 %452, %v449
        %v454 = vpop.permute.xlu0 %453
        %457 = vset.pattern.permute.xlu0 0
        %458 = vperm.xlu0 %457, %v450
        %v459 = vpop.permute.xlu0 %458
        %v461 = vadd.f32 %v441, %v454
        %v462 = vadd.f32 %v446, %v459
        %v463 = vmax.f32 %v461, 0.0
        %v464 = vmax.f32 %v462, 0.0
        %467 = vrot.lane.b32.xlu0 %v463, 4
        %v468 = vpop.permute.xlu0 %467
        %469 = vrot.lane.b32.xlu0 %v464, 4
        %v470 = vpop.permute.xlu0 %469
        %v473 = vsel %vm279, 0.0, %v468
        %v474 = vsel %vm279, 0.0, %v470
        %v475 = vld [vmem:[%s3] sm:$0xff]
        %v476 = vld [vmem:[%s3 + $0x8] sm:$0xff]
        %s477 = scalar_lea.vmem %s3, 16
        %v478 = vld [vmem:[%s477] sm:$0xff]
        %v479 = vld [vmem:[%s477 + $0x8] sm:$0xff]
        %vm480 = vcmask 130048
        %v482 = vsel %vm480, %v478, 0
        %v485 = vsel %vm480, %v479, 0
        %487 = vmatprep.subr.mxu0 0.0
        %488 = vmatpush1.msra.mxu0 %v463
        %489 = vmatprep.subr.mxu0 0.0
        %490 = vmatpush1.msra.mxu0 %v464
        %491 = vmatprep.subr.mxu0 0.0
        %492 = vmatpush1.msra.mxu0 0.0
        %493 = vmatprep.subr.mxu0 0.0
        %494 = vmatpush1.msra.mxu0 0.0
        %495 = vmatprep.subr.mxu0 0.0
        %496 = vmatpush1.msra.mxu0 0.0
        %497 = vmatprep.subr.mxu0 0.0
        %498 = vmatpush1.msra.mxu0 0.0
        %499 = vmatprep.subr.mxu0 0.0
        %500 = vmatpush1.msra.mxu0 0.0
        %501 = vmatprep.subr.mxu0 0.0
        %502 = vmatpush1.msra.mxu0 0.0
        %503 = vmatprep.subr.mxu0 0.0
        %504 = vmatpush1.msra.mxu0 0.0
        %505 = vmatprep.subr.mxu0 0.0
        %506 = vmatpush1.msra.mxu0 0.0
        %507 = vmatprep.subr.mxu0 0.0
        %508 = vmatpush1.msra.mxu0 0.0
        %509 = vmatprep.subr.mxu0 0.0
        %510 = vmatpush1.msra.mxu0 0.0
        %511 = vmatprep.subr.mxu0 0.0
        %512 = vmatpush1.msra.mxu0 0.0
        %513 = vmatprep.subr.mxu0 0.0
        %514 = vmatpush1.msra.mxu0 0.0
        %515 = vmatprep.subr.mxu0 0.0
        %516 = vmatpush1.msra.mxu0 0.0
        %517 = vmatprep.subr.mxu0 0.0
        %518 = vmatpush1.msra.mxu0 0.0
        %519 = vmatprep.subr.mxu0 0.0
        %520 = vmatpush1.msra.mxu0 0.0
        %521 = vmatprep.subr.mxu0 0.0
        %522 = vmatpush1.msra.mxu0 0.0
        %523 = vmatprep.subr.mxu0 0.0
        %524 = vmatpush1.msra.mxu0 0.0
        %525 = vmatprep.subr.mxu0 0.0
        %526 = vmatpush1.msra.mxu0 0.0
        %527 = vmatprep.subr.mxu0 0.0
        %528 = vmatpush1.msra.mxu0 0.0
        %529 = vmatprep.subr.mxu0 0.0
        %530 = vmatpush1.msra.mxu0 0.0
        %531 = vmatprep.subr.mxu0 0.0
        %532 = vmatpush1.msra.mxu0 0.0
        %533 = vmatprep.subr.mxu0 0.0
        %534 = vmatpush1.msra.mxu0 0.0
        %535 = vmatprep.subr.mxu0 0.0
        %536 = vmatpush1.msra.mxu0 0.0
        %537 = vmatprep.subr.mxu0 0.0
        %538 = vmatpush1.msra.mxu0 0.0
        %539 = vmatprep.subr.mxu0 0.0
        %540 = vmatpush1.msra.mxu0 0.0
        %541 = vmatprep.subr.mxu0 0.0
        %542 = vmatpush1.msra.mxu0 0.0
        %543 = vmatprep.subr.mxu0 0.0
        %544 = vmatpush1.msra.mxu0 0.0
        %545 = vmatprep.subr.mxu0 0.0
        %546 = vmatpush1.msra.mxu0 0.0
        %547 = vmatprep.subr.mxu0 0.0
        %548 = vmatpush1.msra.mxu0 0.0
        %549 = vmatprep.subr.mxu0 0.0
        %550 = vmatpush1.msra.mxu0 0.0
        %551 = vmatprep.mubr.f32.mxu0 0.0
        %552 = vmatmul.mubr.f32.gmra.mrb[0].mxu0 %v482
        %v553 = vpop.f32.mrb[0].mxu0
        %v554 = vadd.f32 0.0, %v553
        %v555 = vpop.f32.mrb[0].mxu0
        %556 = vmatprep.mubr.f32.mxu0 0.0
        %557 = vmatmul.mubr.f32.gmra.mrb[0].mxu0 %v485
        %v558 = vpop.f32.mrb[0].mxu0
        %v559 = vadd.f32 0.0, %v558
        %v560 = vpop.f32.mrb[0].mxu0
        %561 = vdwg.mxu0
        %v563 = vsel %vm480, %v475, 0
        %v566 = vsel %vm480, %v476, 0
        %568 = vmatprep.subr.mxu0 0.0
        %569 = vmatpush1.msra.mxu0 %v473
        %570 = vmatprep.subr.mxu0 0.0
        %571 = vmatpush1.msra.mxu0 %v474
        %572 = vmatprep.subr.mxu0 0.0
        %573 = vmatpush1.msra.mxu0 0.0
        %574 = vmatprep.subr.mxu0 0.0
        %575 = vmatpush1.msra.mxu0 0.0
        %576 = vmatprep.subr.mxu0 0.0
        %577 = vmatpush1.msra.mxu0 0.0
        %578 = vmatprep.subr.mxu0 0.0
        %579 = vmatpush1.msra.mxu0 0.0
        %580 = vmatprep.subr.mxu0 0.0
        %581 = vmatpush1.msra.mxu0 0.0
        %582 = vmatprep.subr.mxu0 0.0
        %583 = vmatpush1.msra.mxu0 0.0
        %584 = vmatprep.subr.mxu0 0.0
        %585 = vmatpush1.msra.mxu0 0.0
        %586 = vmatprep.subr.mxu0 0.0
        %587 = vmatpush1.msra.mxu0 0.0
        %588 = vmatprep.subr.mxu0 0.0
        %589 = vmatpush1.msra.mxu0 0.0
        %590 = vmatprep.subr.mxu0 0.0
        %591 = vmatpush1.msra.mxu0 0.0
        %592 = vmatprep.subr.mxu0 0.0
        %593 = vmatpush1.msra.mxu0 0.0
        %594 = vmatprep.subr.mxu0 0.0
        %595 = vmatpush1.msra.mxu0 0.0
        %596 = vmatprep.subr.mxu0 0.0
        %597 = vmatpush1.msra.mxu0 0.0
        %598 = vmatprep.subr.mxu0 0.0
        %599 = vmatpush1.msra.mxu0 0.0
        %600 = vmatprep.subr.mxu0 0.0
        %601 = vmatpush1.msra.mxu0 0.0
        %602 = vmatprep.subr.mxu0 0.0
        %603 = vmatpush1.msra.mxu0 0.0
        %604 = vmatprep.subr.mxu0 0.0
        %605 = vmatpush1.msra.mxu0 0.0
        %606 = vmatprep.subr.mxu0 0.0
        %607 = vmatpush1.msra.mxu0 0.0
        %608 = vmatprep.subr.mxu0 0.0
        %609 = vmatpush1.msra.mxu0 0.0
        %610 = vmatprep.subr.mxu0 0.0
        %611 = vmatpush1.msra.mxu0 0.0
        %612 = vmatprep.subr.mxu0 0.0
        %613 = vmatpush1.msra.mxu0 0.0
        %614 = vmatprep.subr.mxu0 0.0
        %615 = vmatpush1.msra.mxu0 0.0
        %616 = vmatprep.subr.mxu0 0.0
        %617 = vmatpush1.msra.mxu0 0.0
        %618 = vmatprep.subr.mxu0 0.0
        %619 = vmatpush1.msra.mxu0 0.0
        %620 = vmatprep.subr.mxu0 0.0
        %621 = vmatpush1.msra.mxu0 0.0
        %622 = vmatprep.subr.mxu0 0.0
        %623 = vmatpush1.msra.mxu0 0.0
        %624 = vmatprep.subr.mxu0 0.0
        %625 = vmatpush1.msra.mxu0 0.0
        %626 = vmatprep.subr.mxu0 0.0
        %627 = vmatpush1.msra.mxu0 0.0
        %628 = vmatprep.subr.mxu0 0.0
        %629 = vmatpush1.msra.mxu0 0.0
        %630 = vmatprep.subr.mxu0 0.0
        %631 = vmatpush1.msra.mxu0 0.0
        %632 = vmatprep.mubr.f32.mxu0 0.0
        %633 = vmatmul.mubr.f32.gmra.mrb[0].mxu0 %v563
        %v634 = vpop.f32.mrb[0].mxu0
        %v635 = vadd.f32 %v554, %v634
        %v636 = vpop.f32.mrb[0].mxu0
        %637 = vmatprep.mubr.f32.mxu0 0.0
        %638 = vmatmul.mubr.f32.gmra.mrb[0].mxu0 %v566
        %v639 = vpop.f32.mrb[0].mxu0
        %v640 = vadd.f32 %v559, %v639
        %v641 = vpop.f32.mrb[0].mxu0
        %642 = vdwg.mxu0
        %v643 = vld [vmem:[%s4] sm:$0xff]
        %v644 = vld [vmem:[%s4 + $0x8] sm:$0xff]
        %646 = vset.pattern.permute.xlu0 0
        %647 = vperm.xlu0 %646, %v643
        %v648 = vpop.permute.xlu0 %647
        %651 = vset.pattern.permute.xlu0 0
        %652 = vperm.xlu0 %651, %v644
        %v653 = vpop.permute.xlu0 %652
        %v655 = vadd.f32 %v635, %v648
        %v656 = vadd.f32 %v640, %v653
        %v657 = vmax.f32 %v655, 0.0
        %v658 = vmax.f32 %v656, 0.0
        %v659 = vld [vmem:[%s5] sm:$0xff]
        %v660 = vld [vmem:[%s5 + $0x8] sm:$0xff]
        %v661 = vld [vmem:[%s6] sm:$0xff]
        %v662 = vld [vmem:[%s6 + $0x8] sm:$0xff]
        %664 = vset.pattern.permute.xlu0 0
        %665 = vperm.xlu0 %664, %v661
        %v666 = vpop.permute.xlu0 %665
        %669 = vset.pattern.permute.xlu0 0
        %670 = vperm.xlu0 %669, %v662
        %v671 = vpop.permute.xlu0 %670
        %v674 = vsel %vm286, %v659, 0
        %v677 = vsel %vm286, %v660, 0
        %679 = vmatprep.subr.mxu0 0.0
        %680 = vmatpush1.msra.mxu0 %v274
        %681 = vmatprep.subr.mxu0 0.0
        %682 = vmatpush1.msra.mxu0 0.0
        %683 = vmatprep.subr.mxu0 0.0
        %684 = vmatpush1.msra.mxu0 0.0
        %685 = vmatprep.subr.mxu0 0.0
        %686 = vmatpush1.msra.mxu0 0.0
        %687 = vmatprep.subr.mxu0 0.0
        %688 = vmatpush1.msra.mxu0 0.0
        %689 = vmatprep.subr.mxu0 0.0
        %690 = vmatpush1.msra.mxu0 0.0
        %691 = vmatprep.subr.mxu0 0.0
        %692 = vmatpush1.msra.mxu0 0.0
        %693 = vmatprep.subr.mxu0 0.0
        %694 = vmatpush1.msra.mxu0 0.0
        %695 = vmatprep.subr.mxu0 0.0
        %696 = vmatpush1.msra.mxu0 0.0
        %697 = vmatprep.subr.mxu0 0.0
        %698 = vmatpush1.msra.mxu0 0.0
        %699 = vmatprep.subr.mxu0 0.0
        %700 = vmatpush1.msra.mxu0 0.0
        %701 = vmatprep.subr.mxu0 0.0
        %702 = vmatpush1.msra.mxu0 0.0
        %703 = vmatprep.subr.mxu0 0.0
        %704 = vmatpush1.msra.mxu0 0.0
        %705 = vmatprep.subr.mxu0 0.0
        %706 = vmatpush1.msra.mxu0 0.0
        %707 = vmatprep.subr.mxu0 0.0
        %708 = vmatpush1.msra.mxu0 0.0
        %709 = vmatprep.subr.mxu0 0.0
        %710 = vmatpush1.msra.mxu0 0.0
        %711 = vmatprep.subr.mxu0 0.0
        %712 = vmatpush1.msra.mxu0 0.0
        %713 = vmatprep.subr.mxu0 0.0
        %714 = vmatpush1.msra.mxu0 0.0
        %715 = vmatprep.subr.mxu0 0.0
        %716 = vmatpush1.msra.mxu0 0.0
        %717 = vmatprep.subr.mxu0 0.0
        %718 = vmatpush1.msra.mxu0 0.0
        %719 = vmatprep.subr.mxu0 0.0
        %720 = vmatpush1.msra.mxu0 0.0
        %721 = vmatprep.subr.mxu0 0.0
        %722 = vmatpush1.msra.mxu0 0.0
        %723 = vmatprep.subr.mxu0 0.0
        %724 = vmatpush1.msra.mxu0 0.0
        %725 = vmatprep.subr.mxu0 0.0
        %726 = vmatpush1.msra.mxu0 0.0
        %727 = vmatprep.subr.mxu0 0.0
        %728 = vmatpush1.msra.mxu0 0.0
        %729 = vmatprep.subr.mxu0 0.0
        %730 = vmatpush1.msra.mxu0 0.0
        %731 = vmatprep.subr.mxu0 0.0
        %732 = vmatpush1.msra.mxu0 0.0
        %733 = vmatprep.subr.mxu0 0.0
        %734 = vmatpush1.msra.mxu0 0.0
        %735 = vmatprep.subr.mxu0 0.0
        %736 = vmatpush1.msra.mxu0 0.0
        %737 = vmatprep.subr.mxu0 0.0
        %738 = vmatpush1.msra.mxu0 0.0
        %739 = vmatprep.subr.mxu0 0.0
        %740 = vmatpush1.msra.mxu0 0.0
        %741 = vmatprep.subr.mxu0 0.0
        %742 = vmatpush1.msra.mxu0 0.0
        %743 = vmatprep.mubr.f32.mxu0 0.0
        %744 = vmatmul.mubr.f32.gmra.mrb[0].mxu0 %v674
        %v745 = vpop.f32.mrb[0].mxu0
        %v746 = vadd.f32 %v666, %v745
        %v747 = vpop.f32.mrb[0].mxu0
        %748 = vmatprep.mubr.f32.mxu0 0.0
        %749 = vmatmul.mubr.f32.gmra.mrb[0].mxu0 %v677
        %v750 = vpop.f32.mrb[0].mxu0
        %v751 = vadd.f32 %v671, %v750
        %v752 = vpop.f32.mrb[0].mxu0
        %753 = vdwg.mxu0
        %v754 = vadd.f32 %v657, %v746
        %v755 = vadd.f32 %v658, %v751
        %v756 = vmax.f32 %v754, 0.0
        %v757 = vmax.f32 %v755, 0.0
        %758 = vst.msk [vmem:[%s269] sm:$0xff] %vm480, %v756
        %759 = vst.msk [vmem:[%s269 + $0x8] sm:$0xff] %vm480, %v757
        %s760 = sand.u32 %s181, 1
        %s761 = scalar_lea.sflag [#allocation3], %s760
        %s762 = sand.u32 %s181, 1
        %s763 = smul.addr %s762, 16
        %s764 = scalar_lea.vmem [#allocation2], %s763
        // Predicated region
        $region49: #{_lambda_.5} parent=47 // pred_check
          %p765 = pneg %p191
        $region50: #{_lambda_.5} parent=47 // pred_check_branch
          %767 = sbr.rel (%p765) target = $region52
        $region51: #{_lambda_.5} parent=47 // pred_region
          %s769 = ssub.s32 256, 256
          %770 = vsyncadd %s761, %s769
          %s771 = smul.addr %s21, 2
          %s772 = smul.addr %s771, 128
          %s773 = scalar_lea.hbm %s7, %s772
          %s774 = sshll.u32 %s764, 4
          %s775 = int_to_ptr.vmem [resolvable:$true] %s774
          %780 = dma.vmem_to_hbm [thread:$0]  %s775, 256, %s773, %s761, 128, 128, 8
        $region52: #{_lambda_.5} parent=47 // pred_fallthru
          _
      $region48: #{_lambda_.5} parent=5 // pred_fallthru
        _
      %p781 = scmp.le.s32.totalorder 2, %s16
      // Predicated region
      $region53: #{_lambda_.5} parent=5 // pred_check
        %p782 = pneg %p781
      $region54: #{_lambda_.5} parent=5 // pred_check_branch
        %784 = sbr.rel (%p782) target = $region56
      $region55: #{_lambda_.5} parent=5 // pred_region
        %s785 = ssub.s32 %s16, 2
        // Predicated region
        $region57: #{_lambda_.5} parent=55 // pred_check
          %p786 = pneg %p197
        $region58: #{_lambda_.5} parent=55 // pred_check_branch
          %788 = sbr.rel (%p786) target = $region60
        $region59: #{_lambda_.5} parent=55 // pred_region
          %s789 = sand.u32 %s182, 1
          %s790 = scalar_lea.sflag [#allocation3], %s789
          %s791 = sand.u32 %s182, 1
          %s792 = smul.addr %s791, 16
          %s793 = scalar_lea.vmem [#allocation2], %s792
          %794 = dma.done %s790, 256
        $region60: #{_lambda_.5} parent=55 // pred_fallthru
          _
      $region56: #{_lambda_.5} parent=5 // pred_fallthru
        _
    $region6: #{_lambda_.5} parent=1 // loop_footer
      %s20 = sadd.s32 1, %s16
    $region7: #{_lambda_.5} parent=1 // loop_footer_branch
      %15 = sbr.rel target = $region3
    $region8: #{_lambda_.5} parent=1 // loop_exit
      _
    %795 = vsyncpa [#allocation3], 1
    %s796 = scalar_lea.sflag [#allocation3], 1
    %797 = vsyncpa %s796, 1

// kernel: _lambda_.4
$region0: #{_lambda_.4}
  #allocation0 [shape = 'u32[]', space=smem, size = 0x4, offset = 0x4, fixed_abs, tag = 'smem constant byte address 0x4 - core index']
  #allocation1 [shape = 'u32[144,128]{1,0:T(1,128)}', space=vmem, size = 0x12000, scoped, tag = 'internal scratch']
  %s0 = inlined_call_operand.vmem [shape: f32[2,8,16], index: 0, kind: input, shape index: {}]
  %s1 = inlined_call_operand.vmem [shape: f32[2,8,8], index: 1, kind: input, shape index: {}]
  %s2 = inlined_call_operand.vmem [shape: f32[8,1], index: 2, kind: input, shape index: {}]
  %s3 = inlined_call_operand.vmem [shape: f32[2,8,8], index: 3, kind: input, shape index: {}]
  %s4 = inlined_call_operand.hbm [shape: f32[8,1], index: 4, kind: input, shape index: {}]
  %s5 = inlined_call_operand.vmem [shape: f32[2,8,16], index: 5, kind: output, shape index: {}]
  %s6 = sld [smem:[#allocation0]]
  $region57: #{_lambda_.4} parent=0
    _
  %s8 = ssub.s32 1, %s6
  %s9 = scalar_select 0, %s8, %s6
  $region1: #{_lambda_.4} parent=0
    #allocation2 [shape = 'u8[4096]{0}', space=vmem, size = 0x1000, scoped, tag = 'input window, operand 4, single buffered']
    #allocation3 [shape = 's32[2]{0}', space=sflag, size = 0x8, scoped, tag = 'scoped memory for _lambda_.4']
    %10 = vsyncpa [#allocation3], 0
    loop: start=0, step=1, limit=4
    $region2: #{_lambda_.4} parent=1 // loop_pre_header
      _
    $region3: #{_lambda_.4} parent=1 // loop_header
      %s12 = sphi 0, %s16
      %p13 = scmp.ge.s32.totalorder %s12, 4
      %s22 = sphi 0, %s24
      %s25 = sphi 0, %s22
      %s26 = sphi 0, %s25
      %s42 = sphi 0, %s26
      %s46 = sphi 0, %s46
      %s48 = sphi 0, %s46
      %s49 = sphi 0, %s48
      %s63 = sphi 0, %s49
      %s67 = sphi 0, %s67
      %s69 = sphi 0, %s67
      %s70 = sphi 0, %s69
      %s84 = sphi 0, %s70
      %s88 = sphi 0, %s88
      %s90 = sphi 0, %s88
      %s91 = sphi 0, %s90
      %s105 = sphi 0, %s91
      %s109 = sphi 0, %s109
      %s111 = sphi 0, %s109
      %s112 = sphi 0, %s111
      %s126 = sphi 0, %s112
      %s132 = sphi 0, %s134
      %s135 = sphi 0, %s132
      %s136 = sphi 0, %s135
      %s152 = sphi 0, %s136
    $region4: #{_lambda_.4} parent=1 // loop_header_branch
      %15 = sbr.rel (%p13) target = $region8
    $region5: #{_lambda_.4} parent=1 // loop_body
      %s17 = ssub.s32 %s12, 1
      %s18 = ssub.s32 %s12, 2
      %s19 = sadd.s32 %s12, 1
      %s20 = ssub.s32 %s12, %s19
      %p21 = scmp.eq.s32.totalorder %s20, 0
      %s23 = sadd.s32 %s22, 1
      %s24 = scalar_select %p21, %s22, %s23
      %p27 = pneg %p21
      %p28 = scmp.eq.s32.totalorder %s12, 1
      %p29 = por %p27, %p28
      %p30 = scmp.ne.s32.totalorder %s22, %s25
      %p31 = scmp.eq.s32.totalorder %s12, 0
      %p32 = por %p30, %p31
      %p33 = scmp.ne.s32.totalorder %s22, %s25
      %p34 = scmp.eq.s32.totalorder %s17, 1
      %p35 = por %p33, %p34
      %p36 = scmp.ne.s32.totalorder %s25, %s26
      %p37 = scmp.eq.s32.totalorder %s17, 0
      %p38 = por %p36, %p37
      %p39 = scmp.ne.s32.totalorder %s25, %s26
      %p40 = scmp.eq.s32.totalorder %s18, 1
      %p41 = por %p39, %p40
      %p43 = scmp.ne.s32.totalorder %s26, %s42
      %p44 = scmp.eq.s32.totalorder %s18, 0
      %p45 = por %p43, %p44
      %s47 = sadd.s32 %s46, 1
      %p50 = scmp.eq.s32.totalorder %s12, 1
      %p51 = scmp.ne.s32.totalorder %s46, %s48
      %p52 = scmp.eq.s32.totalorder %s12, 0
      %p53 = por %p51, %p52
      %p54 = scmp.ne.s32.totalorder %s46, %s48
      %p55 = scmp.eq.s32.totalorder %s17, 1
      %p56 = por %p54, %p55
      %p57 = scmp.ne.s32.totalorder %s48, %s49
      %p58 = scmp.eq.s32.totalorder %s17, 0
      %p59 = por %p57, %p58
      %p60 = scmp.ne.s32.totalorder %s48, %s49
      %p61 = scmp.eq.s32.totalorder %s18, 1
      %p62 = por %p60, %p61
      %p64 = scmp.ne.s32.totalorder %s49, %s63
      %p65 = scmp.eq.s32.totalorder %s18, 0
      %p66 = por %p64, %p65
      %s68 = sadd.s32 %s67, 1
      %p71 = scmp.eq.s32.totalorder %s12, 1
      %p72 = scmp.ne.s32.totalorder %s67, %s69
      %p73 = scmp.eq.s32.totalorder %s12, 0
      %p74 = por %p72, %p73
      %p75 = scmp.ne.s32.totalorder %s67, %s69
      %p76 = scmp.eq.s32.totalorder %s17, 1
      %p77 = por %p75, %p76
      %p78 = scmp.ne.s32.totalorder %s69, %s70
      %p79 = scmp.eq.s32.totalorder %s17, 0
      %p80 = por %p78, %p79
      %p81 = scmp.ne.s32.totalorder %s69, %s70
      %p82 = scmp.eq.s32.totalorder %s18, 1
      %p83 = por %p81, %p82
      %p85 = scmp.ne.s32.totalorder %s70, %s84
      %p86 = scmp.eq.s32.totalorder %s18, 0
      %p87 = por %p85, %p86
      %s89 = sadd.s32 %s88, 1
      %p92 = scmp.eq.s32.totalorder %s12, 1
      %p93 = scmp.ne.s32.totalorder %s88, %s90
      %p94 = scmp.eq.s32.totalorder %s12, 0
      %p95 = por %p93, %p94
      %p96 = scmp.ne.s32.totalorder %s88, %s90
      %p97 = scmp.eq.s32.totalorder %s17, 1
      %p98 = por %p96, %p97
      %p99 = scmp.ne.s32.totalorder %s90, %s91
      %p100 = scmp.eq.s32.totalorder %s17, 0
      %p101 = por %p99, %p100
      %p102 = scmp.ne.s32.totalorder %s90, %s91
      %p103 = scmp.eq.s32.totalorder %s18, 1
      %p104 = por %p102, %p103
      %p106 = scmp.ne.s32.totalorder %s91, %s105
      %p107 = scmp.eq.s32.totalorder %s18, 0
      %p108 = por %p106, %p107
      %s110 = sadd.s32 %s109, 1
      %p113 = scmp.eq.s32.totalorder %s12, 1
      %p114 = scmp.ne.s32.totalorder %s109, %s111
      %p115 = scmp.eq.s32.totalorder %s12, 0
      %p116 = por %p114, %p115
      %p117 = scmp.ne.s32.totalorder %s109, %s111
      %p118 = scmp.eq.s32.totalorder %s17, 1
      %p119 = por %p117, %p118
      %p120 = scmp.ne.s32.totalorder %s111, %s112
      %p121 = scmp.eq.s32.totalorder %s17, 0
      %p122 = por %p120, %p121
      %p123 = scmp.ne.s32.totalorder %s111, %s112
      %p124 = scmp.eq.s32.totalorder %s18, 1
      %p125 = por %p123, %p124
      %p127 = scmp.ne.s32.totalorder %s112, %s126
      %p128 = scmp.eq.s32.totalorder %s18, 0
      %p129 = por %p127, %p128
      %s130 = ssub.s32 %s12, %s19
      %p131 = scmp.eq.s32.totalorder %s130, 0
      %s133 = sadd.s32 %s132, 1
      %s134 = scalar_select %p131, %s132, %s133
      %p137 = pneg %p131
      %p138 = scmp.eq.s32.totalorder %s12, 1
      %p139 = por %p137, %p138
      %p140 = scmp.ne.s32.totalorder %s132, %s135
      %p141 = scmp.eq.s32.totalorder %s12, 0
      %p142 = por %p140, %p141
      %p143 = scmp.ne.s32.totalorder %s132, %s135
      %p144 = scmp.eq.s32.totalorder %s17, 1
      %p145 = por %p143, %p144
      %p146 = scmp.ne.s32.totalorder %s135, %s136
      %p147 = scmp.eq.s32.totalorder %s17, 0
      %p148 = por %p146, %p147
      %p149 = scmp.ne.s32.totalorder %s135, %s136
      %p150 = scmp.eq.s32.totalorder %s18, 1
      %p151 = por %p149, %p150
      %p153 = scmp.ne.s32.totalorder %s136, %s152
      %p154 = scmp.eq.s32.totalorder %s18, 0
      %p155 = por %p153, %p154
      %p156 = scmp.le.s32.totalorder 1, %s12
      %p157 = scmp.lt.s32.totalorder %s12, 3
      %p158 = pnand %p156, %p157
      %p159 = pneg %p158
      // Predicated region
      $region9: #{_lambda_.4} parent=5 // pred_check
        _
      $region10: #{_lambda_.4} parent=5 // pred_check_branch
        %161 = sbr.rel (%p158) target = $region12
      $region11: #{_lambda_.4} parent=5 // pred_region
        %s162 = ssub.s32 %s12, 1
        // Predicated region
        $region13: #{_lambda_.4} parent=11 // pred_check
          %p163 = pneg %p59
        $region14: #{_lambda_.4} parent=11 // pred_check_branch
          %165 = sbr.rel (%p163) target = $region16
        $region15: #{_lambda_.4} parent=11 // pred_region
          _
        $region16: #{_lambda_.4} parent=11 // pred_fallthru
          _
        // Predicated region
        $region17: #{_lambda_.4} parent=11 // pred_check
          %p166 = pneg %p80
        $region18: #{_lambda_.4} parent=11 // pred_check_branch
          %168 = sbr.rel (%p166) target = $region20
        $region19: #{_lambda_.4} parent=11 // pred_region
          _
        $region20: #{_lambda_.4} parent=11 // pred_fallthru
          _
        // Predicated region
        $region21: #{_lambda_.4} parent=11 // pred_check
          %p169 = pneg %p101
        $region22: #{_lambda_.4} parent=11 // pred_check_branch
          %171 = sbr.rel (%p169) target = $region24
        $region23: #{_lambda_.4} parent=11 // pred_region
          _
        $region24: #{_lambda_.4} parent=11 // pred_fallthru
          _
        // Predicated region
        $region25: #{_lambda_.4} parent=11 // pred_check
          %p172 = pneg %p122
        $region26: #{_lambda_.4} parent=11 // pred_check_branch
          %174 = sbr.rel (%p172) target = $region28
        $region27: #{_lambda_.4} parent=11 // pred_region
          %s176 = ssub.s32 128, 128
          %177 = vsyncadd [#allocation3], %s176
          %s179 = sshll.u32 [#allocation2], 4
          %s180 = int_to_ptr.vmem [resolvable:$true] %s179
          %182 = dma.hbm_to_vmem [thread:$0]  %s4, 128, %s180, [#allocation3]
        $region28: #{_lambda_.4} parent=11 // pred_fallthru
          _
      $region12: #{_lambda_.4} parent=5 // pred_fallthru
        _
      %p183 = scmp.lt.s32.totalorder %s12, 2
      // Predicated region
      $region29: #{_lambda_.4} parent=5 // pred_check
        %p184 = pneg %p183
      $region30: #{_lambda_.4} parent=5 // pred_check_branch
        %186 = sbr.rel (%p184) target = $region32
      $region31: #{_lambda_.4} parent=5 // pred_region
        // Predicated region
        $region33: #{_lambda_.4} parent=31 // pred_check
          %p187 = pneg %p32
        $region34: #{_lambda_.4} parent=31 // pred_check_branch
          %189 = sbr.rel (%p187) target = $region36
        $region35: #{_lambda_.4} parent=31 // pred_region
          %p190 = scmp.lt.s32.totalorder %s12, 1
          %s191 = scalar_select %p190, %s12, 1
          %s192 = smul.addr %s191, 8
          %s193 = scalar_lea.vmem %s0, %s192
        $region36: #{_lambda_.4} parent=31 // pred_fallthru
          _
      $region32: #{_lambda_.4} parent=5 // pred_fallthru
        _
      %p194 = scmp.le.s32.totalorder 1, %s12
      %p195 = scmp.lt.s32.totalorder %s12, 3
      %p196 = pnand %p194, %p195
      %p197 = pneg %p196
      // Predicated region
      $region37: #{_lambda_.4} parent=5 // pred_check
        _
      $region38: #{_lambda_.4} parent=5 // pred_check_branch
        %199 = sbr.rel (%p196) target = $region40
      $region39: #{_lambda_.4} parent=5 // pred_region
        %s200 = ssub.s32 %s12, 1
        // Predicated region
        $region41: #{_lambda_.4} parent=39 // pred_check
          %p201 = pneg %p122
        $region42: #{_lambda_.4} parent=39 // pred_check_branch
          %203 = sbr.rel (%p201) target = $region44
        $region43: #{_lambda_.4} parent=39 // pred_region
          %204 = dma.done [#allocation3], 128
        $region44: #{_lambda_.4} parent=39 // pred_fallthru
          _
        %p205 = scmp.lt.s32.totalorder %s17, 1
        %s206 = scalar_select %p205, %s17, 1
        %s207 = smul.addr %s206, 8
        %s208 = scalar_lea.vmem %s0, %s207
        %p209 = pneg %p38
        %p210 = pneg %p35
        %p211 = pneg %p59
        %p212 = pneg %p56
        %p213 = pneg %p80
        %p214 = pneg %p77
        %p215 = pneg %p101
        %p216 = pneg %p98
        %p217 = pneg %p122
        %p218 = pneg %p119
        %p219 = pneg %p148
        %p220 = pneg %p145
        %p221 = scmp.lt.s32.totalorder %s17, 1
        %s222 = scalar_select %p221, %s17, 1
        %s223 = smul.addr %s222, 8
        %s224 = scalar_lea.vmem %s5, %s223
        %p225 = scmp.lt.s32.totalorder %s17, 1
        %s226 = scalar_select %p225, %s17, 1
        %s227 = smul.addr %s226, 8
        %s228 = scalar_lea.vmem %s0, %s227
        %p229 = scmp.lt.s32.totalorder %s17, 1
        %s230 = scalar_select %p229, %s17, 1
        %s231 = smul.addr %s230, 8
        %s232 = scalar_lea.vmem %s5, %s231
        %v233 = vld [vmem:[%s228] sm:$0xff]
        %235 = vrot.lane.b32.xlu0 %v233, 2
        %v236 = vpop.permute.xlu0 %235
        %vm238 = vcmask 15360
        %v239 = vsel %vm238, 0.0, %v236
        %v240 = vld [vmem:[%s1] sm:$0xff]
        %s241 = scalar_lea.vmem %s1, 8
        %v242 = vld [vmem:[%s241] sm:$0xff]
        %vm243 = vcmask 64512
        %v245 = vsel %vm243, %v242, 0
        %247 = vmatprep.subr.mxu0 0.0
        %248 = vmatpush1.msra.mxu0 %v233
        %249 = vmatprep.subr.mxu0 0.0
        %250 = vmatpush1.msra.mxu0 0.0
        %251 = vmatprep.subr.mxu0 0.0
        %252 = vmatpush1.msra.mxu0 0.0
        %253 = vmatprep.subr.mxu0 0.0
        %254 = vmatpush1.msra.mxu0 0.0
        %255 = vmatprep.subr.mxu0 0.0
        %256 = vmatpush1.msra.mxu0 0.0
        %257 = vmatprep.subr.mxu0 0.0
        %258 = vmatpush1.msra.mxu0 0.0
        %259 = vmatprep.subr.mxu0 0.0
        %260 = vmatpush1.msra.mxu0 0.0
        %261 = vmatprep.subr.mxu0 0.0
        %262 = vmatpush1.msra.mxu0 0.0
        %263 = vmatprep.subr.mxu0 0.0
        %264 = vmatpush1.msra.mxu0 0.0
        %265 = vmatprep.subr.mxu0 0.0
        %266 = vmatpush1.msra.mxu0 0.0
        %267 = vmatprep.subr.mxu0 0.0
        %268 = vmatpush1.msra.mxu0 0.0
        %269 = vmatprep.subr.mxu0 0.0
        %270 = vmatpush1.msra.mxu0 0.0
        %271 = vmatprep.subr.mxu0 0.0
        %272 = vmatpush1.msra.mxu0 0.0
        %273 = vmatprep.subr.mxu0 0.0
        %274 = vmatpush1.msra.mxu0 0.0
        %275 = vmatprep.subr.mxu0 0.0
        %276 = vmatpush1.msra.mxu0 0.0
        %277 = vmatprep.subr.mxu0 0.0
        %278 = vmatpush1.msra.mxu0 0.0
        %279 = vmatprep.subr.mxu0 0.0
        %280 = vmatpush1.msra.mxu0 0.0
        %281 = vmatprep.subr.mxu0 0.0
        %282 = vmatpush1.msra.mxu0 0.0
        %283 = vmatprep.subr.mxu0 0.0
        %284 = vmatpush1.msra.mxu0 0.0
        %285 = vmatprep.subr.mxu0 0.0
        %286 = vmatpush1.msra.mxu0 0.0
        %287 = vmatprep.subr.mxu0 0.0
        %288 = vmatpush1.msra.mxu0 0.0
        %289 = vmatprep.subr.mxu0 0.0
        %290 = vmatpush1.msra.mxu0 0.0
        %291 = vmatprep.subr.mxu0 0.0
        %292 = vmatpush1.msra.mxu0 0.0
        %293 = vmatprep.subr.mxu0 0.0
        %294 = vmatpush1.msra.mxu0 0.0
        %295 = vmatprep.subr.mxu0 0.0
        %296 = vmatpush1.msra.mxu0 0.0
        %297 = vmatprep.subr.mxu0 0.0
        %298 = vmatpush1.msra.mxu0 0.0
        %299 = vmatprep.subr.mxu0 0.0
        %300 = vmatpush1.msra.mxu0 0.0
        %301 = vmatprep.subr.mxu0 0.0
        %302 = vmatpush1.msra.mxu0 0.0
        %303 = vmatprep.subr.mxu0 0.0
        %304 = vmatpush1.msra.mxu0 0.0
        %305 = vmatprep.subr.mxu0 0.0
        %306 = vmatpush1.msra.mxu0 0.0
        %307 = vmatprep.subr.mxu0 0.0
        %308 = vmatpush1.msra.mxu0 0.0
        %309 = vmatprep.subr.mxu0 0.0
        %310 = vmatpush1.msra.mxu0 0.0
        %311 = vmatprep.mubr.f32.mxu0 0.0
        %312 = vmatmul.mubr.f32.gmra.mrb[0].mxu0 %v245
        %v313 = vpop.f32.mrb[0].mxu0
        %v314 = vadd.f32 0.0, %v313
        %v315 = vpop.f32.mrb[0].mxu0
        %316 = vdwg.mxu0
        %v318 = vsel %vm243, %v240, 0
        %320 = vmatprep.subr.mxu0 0.0
        %321 = vmatpush1.msra.mxu0 %v239
        %322 = vmatprep.subr.mxu0 0.0
        %323 = vmatpush1.msra.mxu0 0.0
        %324 = vmatprep.subr.mxu0 0.0
        %325 = vmatpush1.msra.mxu0 0.0
        %326 = vmatprep.subr.mxu0 0.0
        %327 = vmatpush1.msra.mxu0 0.0
        %328 = vmatprep.subr.mxu0 0.0
        %329 = vmatpush1.msra.mxu0 0.0
        %330 = vmatprep.subr.mxu0 0.0
        %331 = vmatpush1.msra.mxu0 0.0
        %332 = vmatprep.subr.mxu0 0.0
        %333 = vmatpush1.msra.mxu0 0.0
        %334 = vmatprep.subr.mxu0 0.0
        %335 = vmatpush1.msra.mxu0 0.0
        %336 = vmatprep.subr.mxu0 0.0
        %337 = vmatpush1.msra.mxu0 0.0
        %338 = vmatprep.subr.mxu0 0.0
        %339 = vmatpush1.msra.mxu0 0.0
        %340 = vmatprep.subr.mxu0 0.0
        %341 = vmatpush1.msra.mxu0 0.0
        %342 = vmatprep.subr.mxu0 0.0
        %343 = vmatpush1.msra.mxu0 0.0
        %344 = vmatprep.subr.mxu0 0.0
        %345 = vmatpush1.msra.mxu0 0.0
        %346 = vmatprep.subr.mxu0 0.0
        %347 = vmatpush1.msra.mxu0 0.0
        %348 = vmatprep.subr.mxu0 0.0
        %349 = vmatpush1.msra.mxu0 0.0
        %350 = vmatprep.subr.mxu0 0.0
        %351 = vmatpush1.msra.mxu0 0.0
        %352 = vmatprep.subr.mxu0 0.0
        %353 = vmatpush1.msra.mxu0 0.0
        %354 = vmatprep.subr.mxu0 0.0
        %355 = vmatpush1.msra.mxu0 0.0
        %356 = vmatprep.subr.mxu0 0.0
        %357 = vmatpush1.msra.mxu0 0.0
        %358 = vmatprep.subr.mxu0 0.0
        %359 = vmatpush1.msra.mxu0 0.0
        %360 = vmatprep.subr.mxu0 0.0
        %361 = vmatpush1.msra.mxu0 0.0
        %362 = vmatprep.subr.mxu0 0.0
        %363 = vmatpush1.msra.mxu0 0.0
        %364 = vmatprep.subr.mxu0 0.0
        %365 = vmatpush1.msra.mxu0 0.0
        %366 = vmatprep.subr.mxu0 0.0
        %367 = vmatpush1.msra.mxu0 0.0
        %368 = vmatprep.subr.mxu0 0.0
        %369 = vmatpush1.msra.mxu0 0.0
        %370 = vmatprep.subr.mxu0 0.0
        %371 = vmatpush1.msra.mxu0 0.0
        %372 = vmatprep.subr.mxu0 0.0
        %373 = vmatpush1.msra.mxu0 0.0
        %374 = vmatprep.subr.mxu0 0.0
        %375 = vmatpush1.msra.mxu0 0.0
        %376 = vmatprep.subr.mxu0 0.0
        %377 = vmatpush1.msra.mxu0 0.0
        %378 = vmatprep.subr.mxu0 0.0
        %379 = vmatpush1.msra.mxu0 0.0
        %380 = vmatprep.subr.mxu0 0.0
        %381 = vmatpush1.msra.mxu0 0.0
        %382 = vmatprep.subr.mxu0 0.0
        %383 = vmatpush1.msra.mxu0 0.0
        %384 = vmatprep.mubr.f32.mxu0 0.0
        %385 = vmatmul.mubr.f32.gmra.mrb[0].mxu0 %v318
        %v386 = vpop.f32.mrb[0].mxu0
        %v387 = vadd.f32 %v314, %v386
        %v388 = vpop.f32.mrb[0].mxu0
        %389 = vdwg.mxu0
        %v390 = vld [vmem:[%s2] sm:$0xff]
        %392 = vset.pattern.permute.xlu0 0
        %393 = vperm.xlu0 %392, %v390
        %v394 = vpop.permute.xlu0 %393
        %v396 = vadd.f32 %v387, %v394
        %v397 = vmax.f32 %v396, 0.0
        %399 = vrot.lane.b32.xlu0 %v397, 2
        %v400 = vpop.permute.xlu0 %399
        %v402 = vsel %vm238, 0.0, %v400
        %v403 = vld [vmem:[%s3] sm:$0xff]
        %s404 = scalar_lea.vmem %s3, 8
        %v405 = vld [vmem:[%s404] sm:$0xff]
        %v407 = vsel %vm243, %v405, 0
        %409 = vmatprep.subr.mxu0 0.0
        %410 = vmatpush1.msra.mxu0 %v397
        %411 = vmatprep.subr.mxu0 0.0
        %412 = vmatpush1.msra.mxu0 0.0
        %413 = vmatprep.subr.mxu0 0.0
        %414 = vmatpush1.msra.mxu0 0.0
        %415 = vmatprep.subr.mxu0 0.0
        %416 = vmatpush1.msra.mxu0 0.0
        %417 = vmatprep.subr.mxu0 0.0
        %418 = vmatpush1.msra.mxu0 0.0
        %419 = vmatprep.subr.mxu0 0.0
        %420 = vmatpush1.msra.mxu0 0.0
        %421 = vmatprep.subr.mxu0 0.0
        %422 = vmatpush1.msra.mxu0 0.0
        %423 = vmatprep.subr.mxu0 0.0
        %424 = vmatpush1.msra.mxu0 0.0
        %425 = vmatprep.subr.mxu0 0.0
        %426 = vmatpush1.msra.mxu0 0.0
        %427 = vmatprep.subr.mxu0 0.0
        %428 = vmatpush1.msra.mxu0 0.0
        %429 = vmatprep.subr.mxu0 0.0
        %430 = vmatpush1.msra.mxu0 0.0
        %431 = vmatprep.subr.mxu0 0.0
        %432 = vmatpush1.msra.mxu0 0.0
        %433 = vmatprep.subr.mxu0 0.0
        %434 = vmatpush1.msra.mxu0 0.0
        %435 = vmatprep.subr.mxu0 0.0
        %436 = vmatpush1.msra.mxu0 0.0
        %437 = vmatprep.subr.mxu0 0.0
        %438 = vmatpush1.msra.mxu0 0.0
        %439 = vmatprep.subr.mxu0 0.0
        %440 = vmatpush1.msra.mxu0 0.0
        %441 = vmatprep.subr.mxu0 0.0
        %442 = vmatpush1.msra.mxu0 0.0
        %443 = vmatprep.subr.mxu0 0.0
        %444 = vmatpush1.msra.mxu0 0.0
        %445 = vmatprep.subr.mxu0 0.0
        %446 = vmatpush1.msra.mxu0 0.0
        %447 = vmatprep.subr.mxu0 0.0
        %448 = vmatpush1.msra.mxu0 0.0
        %449 = vmatprep.subr.mxu0 0.0
        %450 = vmatpush1.msra.mxu0 0.0
        %451 = vmatprep.subr.mxu0 0.0
        %452 = vmatpush1.msra.mxu0 0.0
        %453 = vmatprep.subr.mxu0 0.0
        %454 = vmatpush1.msra.mxu0 0.0
        %455 = vmatprep.subr.mxu0 0.0
        %456 = vmatpush1.msra.mxu0 0.0
        %457 = vmatprep.subr.mxu0 0.0
        %458 = vmatpush1.msra.mxu0 0.0
        %459 = vmatprep.subr.mxu0 0.0
        %460 = vmatpush1.msra.mxu0 0.0
        %461 = vmatprep.subr.mxu0 0.0
        %462 = vmatpush1.msra.mxu0 0.0
        %463 = vmatprep.subr.mxu0 0.0
        %464 = vmatpush1.msra.mxu0 0.0
        %465 = vmatprep.subr.mxu0 0.0
        %466 = vmatpush1.msra.mxu0 0.0
        %467 = vmatprep.subr.mxu0 0.0
        %468 = vmatpush1.msra.mxu0 0.0
        %469 = vmatprep.subr.mxu0 0.0
        %470 = vmatpush1.msra.mxu0 0.0
        %471 = vmatprep.subr.mxu0 0.0
        %472 = vmatpush1.msra.mxu0 0.0
        %473 = vmatprep.mubr.f32.mxu0 0.0
        %474 = vmatmul.mubr.f32.gmra.mrb[0].mxu0 %v407
        %v475 = vpop.f32.mrb[0].mxu0
        %v476 = vadd.f32 0.0, %v475
        %v477 = vpop.f32.mrb[0].mxu0
        %478 = vdwg.mxu0
        %v480 = vsel %vm243, %v403, 0
        %482 = vmatprep.subr.mxu0 0.0
        %483 = vmatpush1.msra.mxu0 %v402
        %484 = vmatprep.subr.mxu0 0.0
        %485 = vmatpush1.msra.mxu0 0.0
        %486 = vmatprep.subr.mxu0 0.0
        %487 = vmatpush1.msra.mxu0 0.0
        %488 = vmatprep.subr.mxu0 0.0
        %489 = vmatpush1.msra.mxu0 0.0
        %490 = vmatprep.subr.mxu0 0.0
        %491 = vmatpush1.msra.mxu0 0.0
        %492 = vmatprep.subr.mxu0 0.0
        %493 = vmatpush1.msra.mxu0 0.0
        %494 = vmatprep.subr.mxu0 0.0
        %495 = vmatpush1.msra.mxu0 0.0
        %496 = vmatprep.subr.mxu0 0.0
        %497 = vmatpush1.msra.mxu0 0.0
        %498 = vmatprep.subr.mxu0 0.0
        %499 = vmatpush1.msra.mxu0 0.0
        %500 = vmatprep.subr.mxu0 0.0
        %501 = vmatpush1.msra.mxu0 0.0
        %502 = vmatprep.subr.mxu0 0.0
        %503 = vmatpush1.msra.mxu0 0.0
        %504 = vmatprep.subr.mxu0 0.0
        %505 = vmatpush1.msra.mxu0 0.0
        %506 = vmatprep.subr.mxu0 0.0
        %507 = vmatpush1.msra.mxu0 0.0
        %508 = vmatprep.subr.mxu0 0.0
        %509 = vmatpush1.msra.mxu0 0.0
        %510 = vmatprep.subr.mxu0 0.0
        %511 = vmatpush1.msra.mxu0 0.0
        %512 = vmatprep.subr.mxu0 0.0
        %513 = vmatpush1.msra.mxu0 0.0
        %514 = vmatprep.subr.mxu0 0.0
        %515 = vmatpush1.msra.mxu0 0.0
        %516 = vmatprep.subr.mxu0 0.0
        %517 = vmatpush1.msra.mxu0 0.0
        %518 = vmatprep.subr.mxu0 0.0
        %519 = vmatpush1.msra.mxu0 0.0
        %520 = vmatprep.subr.mxu0 0.0
        %521 = vmatpush1.msra.mxu0 0.0
        %522 = vmatprep.subr.mxu0 0.0
        %523 = vmatpush1.msra.mxu0 0.0
        %524 = vmatprep.subr.mxu0 0.0
        %525 = vmatpush1.msra.mxu0 0.0
        %526 = vmatprep.subr.mxu0 0.0
        %527 = vmatpush1.msra.mxu0 0.0
        %528 = vmatprep.subr.mxu0 0.0
        %529 = vmatpush1.msra.mxu0 0.0
        %530 = vmatprep.subr.mxu0 0.0
        %531 = vmatpush1.msra.mxu0 0.0
        %532 = vmatprep.subr.mxu0 0.0
        %533 = vmatpush1.msra.mxu0 0.0
        %534 = vmatprep.subr.mxu0 0.0
        %535 = vmatpush1.msra.mxu0 0.0
        %536 = vmatprep.subr.mxu0 0.0
        %537 = vmatpush1.msra.mxu0 0.0
        %538 = vmatprep.subr.mxu0 0.0
        %539 = vmatpush1.msra.mxu0 0.0
        %540 = vmatprep.subr.mxu0 0.0
        %541 = vmatpush1.msra.mxu0 0.0
        %542 = vmatprep.subr.mxu0 0.0
        %543 = vmatpush1.msra.mxu0 0.0
        %544 = vmatprep.subr.mxu0 0.0
        %545 = vmatpush1.msra.mxu0 0.0
        %546 = vmatprep.mubr.f32.mxu0 0.0
        %547 = vmatmul.mubr.f32.gmra.mrb[0].mxu0 %v480
        %v548 = vpop.f32.mrb[0].mxu0
        %v549 = vadd.f32 %v476, %v548
        %v550 = vpop.f32.mrb[0].mxu0
        %551 = vdwg.mxu0
        %v552 = vld [vmem:[#allocation2] sm:$0xff]
        %554 = vset.pattern.permute.xlu0 0
        %555 = vperm.xlu0 %554, %v552
        %v556 = vpop.permute.xlu0 %555
        %v558 = vadd.f32 %v549, %v556
        %v559 = vmax.f32 %v558, 0.0
        %v560 = vadd.f32 %v559, %v233
        %v561 = vmax.f32 %v560, 0.0
        %vm562 = vcmask 130048
        %563 = vst.msk [vmem:[%s232] sm:$0xff] %vm562, %v561
        %p564 = scmp.lt.s32.totalorder %s17, 1
        %s565 = scalar_select %p564, %s17, 1
        %s566 = smul.addr %s565, 8
        %s567 = scalar_lea.vmem %s5, %s566
        // Predicated region
        $region45: #{_lambda_.4} parent=39 // pred_check
          %p568 = pneg %p145
        $region46: #{_lambda_.4} parent=39 // pred_check_branch
          %570 = sbr.rel (%p568) target = $region48
        $region47: #{_lambda_.4} parent=39 // pred_region
          _
        $region48: #{_lambda_.4} parent=39 // pred_fallthru
          _
      $region40: #{_lambda_.4} parent=5 // pred_fallthru
        _
      %p571 = scmp.le.s32.totalorder 2, %s12
      // Predicated region
      $region49: #{_lambda_.4} parent=5 // pred_check
        %p572 = pneg %p571
      $region50: #{_lambda_.4} parent=5 // pred_check_branch
        %574 = sbr.rel (%p572) target = $region52
      $region51: #{_lambda_.4} parent=5 // pred_region
        %s575 = ssub.s32 %s12, 2
        // Predicated region
        $region53: #{_lambda_.4} parent=51 // pred_check
          %p576 = pneg %p151
        $region54: #{_lambda_.4} parent=51 // pred_check_branch
          %578 = sbr.rel (%p576) target = $region56
        $region55: #{_lambda_.4} parent=51 // pred_region
          %p579 = scmp.lt.s32.totalorder %s18, 1
          %s580 = scalar_select %p579, %s18, 1
          %s581 = smul.addr %s580, 8
          %s582 = scalar_lea.vmem %s5, %s581
        $region56: #{_lambda_.4} parent=51 // pred_fallthru
          _
      $region52: #{_lambda_.4} parent=5 // pred_fallthru
        _
    $region6: #{_lambda_.4} parent=1 // loop_footer
      %s16 = sadd.s32 1, %s12
    $region7: #{_lambda_.4} parent=1 // loop_footer_branch
      %11 = sbr.rel target = $region3
    $region8: #{_lambda_.4} parent=1 // loop_exit
      _
    %583 = vsyncpa [#allocation3], 1
    %s584 = scalar_lea.sflag [#allocation3], 1
    %585 = vsyncpa %s584, 1

</llo_original>
